<compile_context>
chip_gen: v6e
topology: v6e:2x2x1
jax: 0.10.0
libtpu: 0.0.40
codegen_flags: <defaults>
</compile_context>

<pallas_src>
import functools

import jax
import jax.numpy as jnp
from jax.experimental import pallas as pl
from jax.experimental.pallas import tpu as pltpu


def _round_up(x, m):
    return (x + m - 1) // m * m


def _wnetwork_kernel(w_ref, x_ref, mean_ref, cov_ref, sw_ref, c_ref,
                     *, n_rows, n_steps):
    """Streams (bt, D) row tiles of X with the matching (bt, 1) transformed
    weight column, accumulating pilot-shifted weighted raw moments directly
    into the resident output blocks:
        sw_ref   <- S_w  = sum_i w_i                        [1, 1] (scratch)
        mean_ref <- S_y  = sum_i w_i (x_i - c)              [1, D]
        cov_ref  <- S_yy = sum_i w_i (x_i - c)(x_i - c)^T   [D, D]
    and finalizing on the last grid step:
        mean = c + S_y / S_w
        cov  = (S_yy / S_w - (S_y/S_w)(S_y/S_w)^T) * N / (N - 1)
    which equals the centered reference  Center^T (W_n * Center) / (N-1) * N.
    """
    step = pl.program_id(0)
    bt = x_ref.shape[0]                      # rows per tile (static block shape)
    last = n_steps - 1                       # static Python int
    tail_rows = n_rows - last * bt           # valid rows in the final tile (static)

    @pl.when(step == 0)
    def _init():
        sw_ref[...] = jnp.zeros_like(sw_ref)
        mean_ref[...] = jnp.zeros_like(mean_ref)
        cov_ref[...] = jnp.zeros_like(cov_ref)
        # Pilot shift c = plain mean of the first tile (cheap, single pass):
        # keeps the one-pass covariance well conditioned when ||mean|| >> std.
        x0 = x_ref[...].astype(jnp.float32)
        if n_rows >= bt:                     # first tile full (static check)
            c_ref[...] = jnp.sum(x0, axis=0, keepdims=True) * (1.0 / bt)
        else:                                # single partial tile: mask stale rows
            row0 = jax.lax.broadcasted_iota(jnp.int32, (bt, 1), 0)
            x0 = jnp.where(row0 < n_rows, x0, 0.0)
            c_ref[...] = jnp.sum(x0, axis=0, keepdims=True) * (1.0 / n_rows)

    def _accumulate(x_t, w_t):
        y = x_t - c_ref[...]                                    # [bt, D]
        wy = y * w_t                                            # [bt, D]
        sw_ref[...] += jnp.sum(w_t, axis=0, keepdims=True)      # [1, 1]
        mean_ref[...] += jnp.sum(wy, axis=0, keepdims=True)     # [1, D]
        # S_yy += Y^T diag(w) Y: contract the batch (sublane) axis of both
        # operands on the MXU (transposed-LHS form, no materialized transpose
        # of the [bt, D] tile).
        cov_ref[...] += jax.lax.dot_general(
            y, wy, (((0,), (0,)), ((), ())),
            preferred_element_type=jnp.float32)                 # [D, D]

    if tail_rows == bt:
        # Batch divides evenly into tiles: unmasked fast path everywhere.
        _accumulate(x_ref[...].astype(jnp.float32), w_ref[...])
    else:
        # Interior tiles: unmasked fast path (no iota / selects on the VPU).
        @pl.when(step != last)
        def _interior():
            _accumulate(x_ref[...].astype(jnp.float32), w_ref[...])

        # Ragged tail tile only: mask BOTH w and x so stale VMEM in the partial
        # block contributes exactly zero (0 * NaN would otherwise poison S_yy).
        @pl.when(step == last)
        def _tail():
            row = jax.lax.broadcasted_iota(jnp.int32, (bt, 1), 0)
            valid = row < tail_rows                              # [bt, 1]
            _accumulate(jnp.where(valid, x_ref[...].astype(jnp.float32), 0.0),
                        jnp.where(valid, w_ref[...], 0.0))

    @pl.when(step == last)
    def _finalize():
        inv_sw = 1.0 / sw_ref[...]                               # exact, [1, 1]
        dm = mean_ref[...] * inv_sw                              # [1, D] = mean - c
        mean_ref[...] = c_ref[...] + dm
        # Outer product dm^T dm as a K=1 contraction (no explicit transpose).
        mmt = jax.lax.dot_general(
            dm, dm, (((0,), (0,)), ((), ())),
            preferred_element_type=jnp.float32)                  # [D, D]
        bias = float(n_rows) / float(max(n_rows - 1, 1))         # "/(N-1) * N"
        cov_ref[...] = (cov_ref[...] * inv_sw - mmt) * bias


def _choose_tile_and_vmem(n, d, block_rows, vmem_target_bytes):
    """Pick the batch tile so double-buffered X + resident cov fit the VMEM
    target (sized for v7x's smaller VMEM; generous on v5e/v6e), and derive an
    explicit vmem_limit_bytes (v5e's scoped default is only ~16 MiB)."""
    lane_d = max(128, _round_up(d, 128))     # lane-padded row width (f32 words)
    sub_d = _round_up(max(d, 1), 8)          # sublane-padded D for the cov block
    # Resident across the grid: cov + mean + pilot shift (+ S_w + slack).
    resident = (sub_d * lane_d + 3 * 8 * lane_d + 8 * 128) * 4
    stream_budget = max(vmem_target_bytes - resident, 2 << 20)
    # Per streamed row, double-buffered: X row (lane_d f32) + the (bt, 1) weight
    # column, which pads to a full 128-lane word row in VMEM.
    per_row = (2 * lane_d + 2 * 128) * 4
    cap = max(8, min(int(block_rows), stream_budget // per_row))
    bt = n if n <= cap else max(8, (cap // 8) * 8)
    est = resident + per_row * bt + (1 << 20)
    vmem_limit = int(min(max(est + (8 << 20), 32 << 20), 48 << 20))
    return bt, vmem_limit


def wnetwork_forward(x, w_param, *, times=2.0, block_rows=8192,
                     vmem_target_bytes=24 << 20):
    """x: [N, D], w_param: [N, 1] -> (W [N, 1], mean [D], cov [D, D])."""
    n, d = x.shape
    assert w_param.shape == (n, 1)
    times = float(times)

    # W path (lane-dense): the sigmoid affine re-weighting IS the W output, so
    # compute it once in XLA and feed the transformed column to the kernel.
    w = jax.nn.sigmoid(w_param) * (times - 1.0 / times) + 1.0 / times   # [N, 1]
    w32 = w.astype(jnp.float32)

    bt, vmem_limit = _choose_tile_and_vmem(n, d, block_rows, vmem_target_bytes)
    n_steps = pl.cdiv(n, bt)

    kernel = functools.partial(_wnetwork_kernel, n_rows=n, n_steps=n_steps)

    mean2d, cov = pl.pallas_call(
        kernel,
        grid_spec=pltpu.PrefetchScalarGridSpec(
            num_scalar_prefetch=0,
            grid=(n_steps,),
            in_specs=[
                pl.BlockSpec((bt, 1), lambda i: (i, 0)),   # transformed W column
                pl.BlockSpec((bt, d), lambda i: (i, 0)),   # X row tiles (streamed)
            ],
            out_specs=(
                pl.BlockSpec((1, d), lambda i: (0, 0)),    # resident: S_y -> mean
                pl.BlockSpec((d, d), lambda i: (0, 0)),    # resident: S_yy -> cov
            ),
            scratch_shapes=[
                pltpu.VMEM((1, 1), jnp.float32),           # S_w
                pltpu.VMEM((1, d), jnp.float32),           # pilot shift c
            ],
        ),
        out_shape=(
            jax.ShapeDtypeStruct((1, d), jnp.float32),
            jax.ShapeDtypeStruct((d, d), jnp.float32),
        ),
        # The single grid axis carries the resident accumulators -> reduction.
        compiler_params=pltpu.CompilerParams(
            dimension_semantics=("arbitrary",),
            vmem_limit_bytes=vmem_limit),
    )(w32, x)

    return w, mean2d.reshape(-1), cov


def _reference(x, w_param, times=2.0):
    """Pure-JAX transcription of WNetwork.forward / wMCov (centered two-pass)."""
    w = jax.nn.sigmoid(w_param) * (times - 1.0 / times) + 1.0 / times
    wn = w / jnp.sum(w)
    mean = jnp.sum(x * wn, axis=0)
    center = x - mean
    n = x.shape[0]
    cov = (center.T @ (wn * center)) / (n - 1) * n
    return w, mean, cov


if __name__ == "__main__":
    key = jax.random.PRNGKey(0)
    k_x, k_w = jax.random.split(key)

    num, d, times = 300, 16, 2.0
    # Non-zero mean stresses the one-pass covariance path (pilot shift).
    x = jax.random.normal(k_x, (num, d), jnp.float32) + 3.0
    w_param = jax.random.normal(k_w, (num, 1), jnp.float32)  # ~ torch.randn(num, 1)

    w_ref, mean_ref, cov_ref = _reference(x, w_param, times)

    # (a) small tile -> multi-step grid with a ragged tail (300 = 2*128 + 44):
    #     exercises cross-tile accumulation, the masked tail path and finalize.
    out_a = wnetwork_forward(x, w_param, times=times, block_rows=128)
    # (b) default sizing: the whole batch fits in a single tile (fast path only).
    out_b = wnetwork_forward(x, w_param, times=times)
    (w_a, mean_a, cov_a), (w_b, mean_b, cov_b) = jax.block_until_ready((out_a, out_b))

    for w_o, mean_o, cov_o in ((w_a, mean_a, cov_a), (w_b, mean_b, cov_b)):
        assert w_o.shape == (num, 1) and mean_o.shape == (d,) and cov_o.shape == (d, d)
        assert jnp.allclose(w_o, w_ref, atol=1e-6, rtol=1e-6)
        assert jnp.allclose(mean_o, mean_ref, atol=1e-4, rtol=1e-4)
        assert jnp.allclose(cov_o, cov_ref, atol=1e-4, rtol=1e-4)
    print("KERNEL_OK")
</pallas_src>

<mosaic_0001>
module attributes {stable_mosaic.version = 11 : i64} {
  func.func @_wnetwork_kernel(%arg0: i32, %arg1: memref<128x1xf32, #tpu.memory_space<vmem>>, %arg2: memref<128x16xf32, #tpu.memory_space<vmem>>, %arg3: memref<1x16xf32, #tpu.memory_space<vmem>>, %arg4: memref<16x16xf32, #tpu.memory_space<vmem>>, %arg5: memref<1x1xf32, #tpu.memory_space<vmem>>, %arg6: memref<1x16xf32, #tpu.memory_space<vmem>>) attributes {dimension_semantics = [#tpu.dimension_semantics<arbitrary>], iteration_bounds = array<i64: 3>, scalar_prefetch = 0 : i64, scratch_operands = 2 : i64, tpu.core_type = #tpu.core_type<tc>, window_params = [{transform_indices = @transform_0, window_bounds = array<i64: 128, 1>}, {transform_indices = @transform_1, window_bounds = array<i64: 128, 16>}, {pipeline_mode = #tpu.pipeline_mode<synchronous>, transform_indices = @transform_2, window_bounds = array<i64: 1, 16>}, {pipeline_mode = #tpu.pipeline_mode<synchronous>, transform_indices = @transform_3, window_bounds = array<i64: 16, 16>}]} {
    %c0_i32 = arith.constant 0 : i32
    %0 = arith.cmpi eq, %arg0, %c0_i32 : i32
    %1 = arith.extui %0 : i1 to i32
    %c0_i32_0 = arith.constant 0 : i32
    %2 = arith.cmpi ne, %1, %c0_i32_0 : i32
    scf.if %2 {
      %cst = arith.constant 0.000000e+00 : f32
      %12 = vector.broadcast %cst : f32 to vector<1x1xf32>
      %c0 = arith.constant 0 : index
      %c0_6 = arith.constant 0 : index
      %13 = vector.load %arg5[%c0, %c0_6] : memref<1x1xf32, #tpu.memory_space<vmem>>, vector<1x1xf32>
      tpu.vector_store %arg5[%c0, %c0_6], %12 {strides = array<i32>} : memref<1x1xf32, #tpu.memory_space<vmem>>, vector<1x1xf32>,
      %cst_7 = arith.constant 0.000000e+00 : f32
      %14 = vector.broadcast %cst_7 : f32 to vector<1x16xf32>
      %c0_8 = arith.constant 0 : index
      %c0_9 = arith.constant 0 : index
      %15 = vector.load %arg3[%c0_8, %c0_9] : memref<1x16xf32, #tpu.memory_space<vmem>>, vector<1x16xf32>
      tpu.vector_store %arg3[%c0_8, %c0_9], %14 {strides = array<i32>} : memref<1x16xf32, #tpu.memory_space<vmem>>, vector<1x16xf32>,
      %cst_10 = arith.constant 0.000000e+00 : f32
      %16 = vector.broadcast %cst_10 : f32 to vector<16x16xf32>
      %c0_11 = arith.constant 0 : index
      %c0_12 = arith.constant 0 : index
      %17 = vector.load %arg4[%c0_11, %c0_12] : memref<16x16xf32, #tpu.memory_space<vmem>>, vector<16x16xf32>
      tpu.vector_store %arg4[%c0_11, %c0_12], %16 {strides = array<i32>} : memref<16x16xf32, #tpu.memory_space<vmem>>, vector<16x16xf32>,
      %c0_13 = arith.constant 0 : index
      %c0_14 = arith.constant 0 : index
      %18 = vector.load %arg2[%c0_13, %c0_14] : memref<128x16xf32, #tpu.memory_space<vmem>>, vector<128x16xf32>
      %cst_15 = arith.constant dense<0.000000e+00> : vector<16xf32>
      %19 = vector.multi_reduction <add>, %18, %cst_15 [0] : vector<128x16xf32> to vector<16xf32>
      %20 = vector.shape_cast %19 : vector<16xf32> to vector<1x16xf32>
      %cst_16 = arith.constant 7.812500e-03 : f32
      %21 = vector.broadcast %cst_16 : f32 to vector<1x16xf32>
      %22 = arith.mulf %20, %21 : vector<1x16xf32>
      %c0_17 = arith.constant 0 : index
      %c0_18 = arith.constant 0 : index
      %23 = vector.load %arg6[%c0_17, %c0_18] : memref<1x16xf32, #tpu.memory_space<vmem>>, vector<1x16xf32>
      tpu.vector_store %arg6[%c0_17, %c0_18], %22 {strides = array<i32>} : memref<1x16xf32, #tpu.memory_space<vmem>>, vector<1x16xf32>,
    } else {
    }
    %c2_i32 = arith.constant 2 : i32
    %3 = arith.cmpi ne, %arg0, %c2_i32 : i32
    %4 = arith.extui %3 : i1 to i32
    %c0_i32_1 = arith.constant 0 : i32
    %5 = arith.cmpi ne, %4, %c0_i32_1 : i32
    scf.if %5 {
      %c0 = arith.constant 0 : index
      %c0_6 = arith.constant 0 : index
      %12 = vector.load %arg2[%c0, %c0_6] : memref<128x16xf32, #tpu.memory_space<vmem>>, vector<128x16xf32>
      %c0_7 = arith.constant 0 : index
      %c0_8 = arith.constant 0 : index
      %13 = vector.load %arg1[%c0_7, %c0_8] : memref<128x1xf32, #tpu.memory_space<vmem>>, vector<128x1xf32>
      %c0_9 = arith.constant 0 : index
      %c0_10 = arith.constant 0 : index
      %14 = vector.load %arg6[%c0_9, %c0_10] : memref<1x16xf32, #tpu.memory_space<vmem>>, vector<1x16xf32>
      %15 = vector.broadcast %14 : vector<1x16xf32> to vector<128x16xf32>
      %16 = arith.subf %12, %15 : vector<128x16xf32>
      %17 = vector.broadcast %13 : vector<128x1xf32> to vector<128x16xf32>
      %18 = arith.mulf %16, %17 : vector<128x16xf32>
      %c0_11 = arith.constant 0 : index
      %c0_12 = arith.constant 0 : index
      %19 = vector.load %arg5[%c0_11, %c0_12] : memref<1x1xf32, #tpu.memory_space<vmem>>, vector<1x1xf32>
      %cst = arith.constant dense<0.000000e+00> : vector<1xf32>
      %20 = vector.multi_reduction <add>, %13, %cst [0] : vector<128x1xf32> to vector<1xf32>
      %21 = vector.shape_cast %20 : vector<1xf32> to vector<1x1xf32>
      %22 = arith.addf %19, %21 : vector<1x1xf32>
      %c0_13 = arith.constant 0 : index
      %c0_14 = arith.constant 0 : index
      %23 = vector.load %arg5[%c0_13, %c0_14] : memref<1x1xf32, #tpu.memory_space<vmem>>, vector<1x1xf32>
      tpu.vector_store %arg5[%c0_13, %c0_14], %22 {strides = array<i32>} : memref<1x1xf32, #tpu.memory_space<vmem>>, vector<1x1xf32>,
      %c0_15 = arith.constant 0 : index
      %c0_16 = arith.constant 0 : index
      %24 = vector.load %arg3[%c0_15, %c0_16] : memref<1x16xf32, #tpu.memory_space<vmem>>, vector<1x16xf32>
      %cst_17 = arith.constant dense<0.000000e+00> : vector<16xf32>
      %25 = vector.multi_reduction <add>, %18, %cst_17 [0] : vector<128x16xf32> to vector<16xf32>
      %26 = vector.shape_cast %25 : vector<16xf32> to vector<1x16xf32>
      %27 = arith.addf %24, %26 : vector<1x16xf32>
      %c0_18 = arith.constant 0 : index
      %c0_19 = arith.constant 0 : index
      %28 = vector.load %arg3[%c0_18, %c0_19] : memref<1x16xf32, #tpu.memory_space<vmem>>, vector<1x16xf32>
      tpu.vector_store %arg3[%c0_18, %c0_19], %27 {strides = array<i32>} : memref<1x16xf32, #tpu.memory_space<vmem>>, vector<1x16xf32>,
      %c0_20 = arith.constant 0 : index
      %c0_21 = arith.constant 0 : index
      %29 = vector.load %arg4[%c0_20, %c0_21] : memref<16x16xf32, #tpu.memory_space<vmem>>, vector<16x16xf32>
      %cst_22 = arith.constant dense<0.000000e+00> : vector<16x16xf32>
      %30 = tpu.matmul %16, %18, %cst_22 {dimension_numbers = #tpu.dot_dimension_numbers<[0], [0], [1], [1], [0, 1, 1, 1], [], []>} : vector<128x16xf32>, vector<128x16xf32>, vector<16x16xf32> -> vector<16x16xf32>
      %31 = arith.addf %29, %30 : vector<16x16xf32>
      %c0_23 = arith.constant 0 : index
      %c0_24 = arith.constant 0 : index
      %32 = vector.load %arg4[%c0_23, %c0_24] : memref<16x16xf32, #tpu.memory_space<vmem>>, vector<16x16xf32>
      tpu.vector_store %arg4[%c0_23, %c0_24], %31 {strides = array<i32>} : memref<16x16xf32, #tpu.memory_space<vmem>>, vector<16x16xf32>,
    } else {
    }
    %c2_i32_2 = arith.constant 2 : i32
    %6 = arith.cmpi eq, %arg0, %c2_i32_2 : i32
    %7 = arith.extui %6 : i1 to i32
    %c0_i32_3 = arith.constant 0 : i32
    %8 = arith.cmpi ne, %7, %c0_i32_3 : i32
    scf.if %8 {
      %12 = tpu.iota {dimensions = array<i32: 0>} : vector<128x1xi32>
      %c44_i32 = arith.constant 44 : i32
      %13 = vector.broadcast %c44_i32 : i32 to vector<128x1xi32>
      %14 = arith.cmpi slt, %12, %13 : vector<128x1xi32>
      %c0 = arith.constant 0 : index
      %c0_6 = arith.constant 0 : index
      %15 = vector.load %arg2[%c0, %c0_6] : memref<128x16xf32, #tpu.memory_space<vmem>>, vector<128x16xf32>
      %cst = arith.constant 0.000000e+00 : f32
      %16 = vector.shape_cast %14 : vector<128x1xi1> to vector<128x1xi1>
      %17 = vector.broadcast %16 : vector<128x1xi1> to vector<128x16xi1>
      %18 = vector.broadcast %cst : f32 to vector<128x16xf32>
      %19 = arith.select %17, %15, %18 : vector<128x16xi1>, vector<128x16xf32>
      %c0_7 = arith.constant 0 : index
      %c0_8 = arith.constant 0 : index
      %20 = vector.load %arg1[%c0_7, %c0_8] : memref<128x1xf32, #tpu.memory_space<vmem>>, vector<128x1xf32>
      %cst_9 = arith.constant 0.000000e+00 : f32
      %21 = vector.broadcast %cst_9 : f32 to vector<128x1xf32>
      %22 = arith.select %14, %20, %21 : vector<128x1xi1>, vector<128x1xf32>
      %c0_10 = arith.constant 0 : index
      %c0_11 = arith.constant 0 : index
      %23 = vector.load %arg6[%c0_10, %c0_11] : memref<1x16xf32, #tpu.memory_space<vmem>>, vector<1x16xf32>
      %24 = vector.broadcast %23 : vector<1x16xf32> to vector<128x16xf32>
      %25 = arith.subf %19, %24 : vector<128x16xf32>
      %26 = vector.broadcast %22 : vector<128x1xf32> to vector<128x16xf32>
      %27 = arith.mulf %25, %26 : vector<128x16xf32>
      %c0_12 = arith.constant 0 : index
      %c0_13 = arith.constant 0 : index
      %28 = vector.load %arg5[%c0_12, %c0_13] : memref<1x1xf32, #tpu.memory_space<vmem>>, vector<1x1xf32>
      %cst_14 = arith.constant dense<0.000000e+00> : vector<1xf32>
      %29 = vector.multi_reduction <add>, %22, %cst_14 [0] : vector<128x1xf32> to vector<1xf32>
      %30 = vector.shape_cast %29 : vector<1xf32> to vector<1x1xf32>
      %31 = arith.addf %28, %30 : vector<1x1xf32>
      %c0_15 = arith.constant 0 : index
      %c0_16 = arith.constant 0 : index
      %32 = vector.load %arg5[%c0_15, %c0_16] : memref<1x1xf32, #tpu.memory_space<vmem>>, vector<1x1xf32>
      tpu.vector_store %arg5[%c0_15, %c0_16], %31 {strides = array<i32>} : memref<1x1xf32, #tpu.memory_space<vmem>>, vector<1x1xf32>,
      %c0_17 = arith.constant 0 : index
      %c0_18 = arith.constant 0 : index
      %33 = vector.load %arg3[%c0_17, %c0_18] : memref<1x16xf32, #tpu.memory_space<vmem>>, vector<1x16xf32>
      %cst_19 = arith.constant dense<0.000000e+00> : vector<16xf32>
      %34 = vector.multi_reduction <add>, %27, %cst_19 [0] : vector<128x16xf32> to vector<16xf32>
      %35 = vector.shape_cast %34 : vector<16xf32> to vector<1x16xf32>
      %36 = arith.addf %33, %35 : vector<1x16xf32>
      %c0_20 = arith.constant 0 : index
      %c0_21 = arith.constant 0 : index
      %37 = vector.load %arg3[%c0_20, %c0_21] : memref<1x16xf32, #tpu.memory_space<vmem>>, vector<1x16xf32>
      tpu.vector_store %arg3[%c0_20, %c0_21], %36 {strides = array<i32>} : memref<1x16xf32, #tpu.memory_space<vmem>>, vector<1x16xf32>,
      %c0_22 = arith.constant 0 : index
      %c0_23 = arith.constant 0 : index
      %38 = vector.load %arg4[%c0_22, %c0_23] : memref<16x16xf32, #tpu.memory_space<vmem>>, vector<16x16xf32>
      %cst_24 = arith.constant dense<0.000000e+00> : vector<16x16xf32>
      %39 = tpu.matmul %25, %27, %cst_24 {dimension_numbers = #tpu.dot_dimension_numbers<[0], [0], [1], [1], [0, 1, 1, 1], [], []>} : vector<128x16xf32>, vector<128x16xf32>, vector<16x16xf32> -> vector<16x16xf32>
      %40 = arith.addf %38, %39 : vector<16x16xf32>
      %c0_25 = arith.constant 0 : index
      %c0_26 = arith.constant 0 : index
      %41 = vector.load %arg4[%c0_25, %c0_26] : memref<16x16xf32, #tpu.memory_space<vmem>>, vector<16x16xf32>
      tpu.vector_store %arg4[%c0_25, %c0_26], %40 {strides = array<i32>} : memref<16x16xf32, #tpu.memory_space<vmem>>, vector<16x16xf32>,
    } else {
    }
    %c2_i32_4 = arith.constant 2 : i32
    %9 = arith.cmpi eq, %arg0, %c2_i32_4 : i32
    %10 = arith.extui %9 : i1 to i32
    %c0_i32_5 = arith.constant 0 : i32
    %11 = arith.cmpi ne, %10, %c0_i32_5 : i32
    scf.if %11 {
      %c0 = arith.constant 0 : index
      %c0_6 = arith.constant 0 : index
      %12 = vector.load %arg5[%c0, %c0_6] : memref<1x1xf32, #tpu.memory_space<vmem>>, vector<1x1xf32>
      %cst = arith.constant 1.000000e+00 : f32
      %13 = vector.broadcast %cst : f32 to vector<1x1xf32>
      %14 = arith.divf %13, %12 : vector<1x1xf32>
      %c0_7 = arith.constant 0 : index
      %c0_8 = arith.constant 0 : index
      %15 = vector.load %arg3[%c0_7, %c0_8] : memref<1x16xf32, #tpu.memory_space<vmem>>, vector<1x16xf32>
      %16 = vector.broadcast %14 : vector<1x1xf32> to vector<1x16xf32>
      %17 = arith.mulf %15, %16 : vector<1x16xf32>
      %c0_9 = arith.constant 0 : index
      %c0_10 = arith.constant 0 : index
      %18 = vector.load %arg6[%c0_9, %c0_10] : memref<1x16xf32, #tpu.memory_space<vmem>>, vector<1x16xf32>
      %19 = arith.addf %18, %17 : vector<1x16xf32>
      %c0_11 = arith.constant 0 : index
      %c0_12 = arith.constant 0 : index
      %20 = vector.load %arg3[%c0_11, %c0_12] : memref<1x16xf32, #tpu.memory_space<vmem>>, vector<1x16xf32>
      tpu.vector_store %arg3[%c0_11, %c0_12], %19 {strides = array<i32>} : memref<1x16xf32, #tpu.memory_space<vmem>>, vector<1x16xf32>,
      %cst_13 = arith.constant dense<0.000000e+00> : vector<16x16xf32>
      %21 = tpu.matmul %17, %17, %cst_13 {dimension_numbers = #tpu.dot_dimension_numbers<[0], [0], [1], [1], [0, 1, 1, 1], [], []>} : vector<1x16xf32>, vector<1x16xf32>, vector<16x16xf32> -> vector<16x16xf32>
      %c0_14 = arith.constant 0 : index
      %c0_15 = arith.constant 0 : index
      %22 = vector.load %arg4[%c0_14, %c0_15] : memref<16x16xf32, #tpu.memory_space<vmem>>, vector<16x16xf32>
      %23 = vector.broadcast %14 : vector<1x1xf32> to vector<16x16xf32>
      %24 = arith.mulf %22, %23 : vector<16x16xf32>
      %25 = arith.subf %24, %21 : vector<16x16xf32>
      %cst_16 = arith.constant 1.00334454 : f32
      %26 = vector.broadcast %cst_16 : f32 to vector<16x16xf32>
      %27 = arith.mulf %25, %26 : vector<16x16xf32>
      %c0_17 = arith.constant 0 : index
      %c0_18 = arith.constant 0 : index
      %28 = vector.load %arg4[%c0_17, %c0_18] : memref<16x16xf32, #tpu.memory_space<vmem>>, vector<16x16xf32>
      tpu.vector_store %arg4[%c0_17, %c0_18], %27 {strides = array<i32>} : memref<16x16xf32, #tpu.memory_space<vmem>>, vector<16x16xf32>,
    } else {
    }
    return
  }
  func.func @transform_0(%arg0: i32) -> (i32, i32) {
    %c0_i32 = arith.constant 0 : i32
    %c0_i32_0 = arith.constant 0 : i32
    return %arg0, %c0_i32 : i32, i32
  }
  func.func @transform_1(%arg0: i32) -> (i32, i32) {
    %c0_i32 = arith.constant 0 : i32
    %c0_i32_0 = arith.constant 0 : i32
    return %arg0, %c0_i32 : i32, i32
  }
  func.func @transform_2(%arg0: i32) -> (i32, i32) {
    %c0_i32 = arith.constant 0 : i32
    %c0_i32_0 = arith.constant 0 : i32
    %c0_i32_1 = arith.constant 0 : i32
    return %c0_i32, %c0_i32_0 : i32, i32
  }
  func.func @transform_3(%arg0: i32) -> (i32, i32) {
    %c0_i32 = arith.constant 0 : i32
    %c0_i32_0 = arith.constant 0 : i32
    %c0_i32_1 = arith.constant 0 : i32
    return %c0_i32, %c0_i32_0 : i32, i32
  }
}

</mosaic_0001>

<llo_original>
// kernel: tpu_custom_call.1
$region0: #{tpu_custom_call.1}
  #allocation0 [shape = 'u32[]', space=smem, size = 0x4, offset = 0x4, fixed_abs, tag = 'smem constant byte address 0x4 - core index']
  #allocation1 [shape = 'u32[144,128]{1,0:T(1,128)}', space=vmem, size = 0x12000, scoped, tag = 'internal scratch']
  #allocation2 [shape = 'f32[1,1]{1,0:T(1,128)}', space=vmem, size = 0x200, scoped, tag = 'scratch operand']
  #allocation3 [shape = 'f32[1,16]{1,0:T(1,128)}', space=vmem, size = 0x200, scoped, tag = 'scratch operand']
  %s0 = inlined_call_operand.vmem [shape: f32[300,1], index: 0, kind: input, shape index: {}]
  %s1 = inlined_call_operand.vmem [shape: f32[300,16], index: 1, kind: input, shape index: {}]
  %s2 = inlined_call_operand.hbm [shape: f32[1,16], index: 2, kind: output, shape index: {0}]
  %s3 = inlined_call_operand.hbm [shape: f32[16,16], index: 3, kind: output, shape index: {1}]
  %4 = xla_tuple %s2, %s3
  %s5 = sld [smem:[#allocation0]]
  $region61: #{tpu_custom_call.1} parent=0
    _
  %s7 = ssub.s32 1, %s5
  %s8 = scalar_select 0, %s7, %s5
  $region1: #{tpu_custom_call.1} parent=0
    #allocation4 [shape = 'u8[512]{0}', space=vmem, size = 0x400, scoped, tag = 'output window, operand 0, single buffered']
    #allocation5 [shape = 's32[2]{0}', space=sflag, size = 0x8, scoped, tag = 'scoped memory for tpu_custom_call.1']
    #allocation6 [shape = 'u8[8192]{0}', space=vmem, size = 0x2000, scoped, tag = 'output window, operand 1, single buffered']
    #allocation7 [shape = 's32[1]{0}', space=sflag, size = 0x4, scoped, tag = 'scoped memory for tpu_custom_call.1']
    %9 = vsyncpa [#allocation5], 0
    %10 = vsyncpa [#allocation7], 0
    loop: start=0, step=1, limit=5
    $region2: #{tpu_custom_call.1} parent=1 // loop_pre_header
      _
    $region3: #{tpu_custom_call.1} parent=1 // loop_header
      %s12 = sphi 0, %s16
      %p13 = scmp.ge.s32.totalorder %s12, 5
      %s22 = sphi 0, %s24
      %s25 = sphi 0, %s22
      %s26 = sphi 0, %s25
      %s42 = sphi 0, %s26
      %s48 = sphi 0, %s50
      %s51 = sphi 0, %s48
      %s52 = sphi 0, %s51
      %s68 = sphi 0, %s52
      %s72 = sphi 0, %s72
      %s74 = sphi 0, %s72
      %s75 = sphi 0, %s74
      %s89 = sphi 0, %s75
      %s93 = sphi 0, %s93
      %s95 = sphi 0, %s93
      %s96 = sphi 0, %s95
      %s110 = sphi 0, %s96
    $region4: #{tpu_custom_call.1} parent=1 // loop_header_branch
      %15 = sbr.rel (%p13) target = $region8
    $region5: #{tpu_custom_call.1} parent=1 // loop_body
      %s17 = ssub.s32 %s12, 1
      %s18 = ssub.s32 %s12, 2
      %s19 = sadd.s32 %s12, 1
      %s20 = ssub.s32 %s12, %s19
      %p21 = scmp.eq.s32.totalorder %s20, 0
      %s23 = sadd.s32 %s22, 1
      %s24 = scalar_select %p21, %s22, %s23
      %p27 = pneg %p21
      %p28 = scmp.eq.s32.totalorder %s12, 2
      %p29 = por %p27, %p28
      %p30 = scmp.ne.s32.totalorder %s22, %s25
      %p31 = scmp.eq.s32.totalorder %s12, 0
      %p32 = por %p30, %p31
      %p33 = scmp.ne.s32.totalorder %s22, %s25
      %p34 = scmp.eq.s32.totalorder %s17, 2
      %p35 = por %p33, %p34
      %p36 = scmp.ne.s32.totalorder %s25, %s26
      %p37 = scmp.eq.s32.totalorder %s17, 0
      %p38 = por %p36, %p37
      %p39 = scmp.ne.s32.totalorder %s25, %s26
      %p40 = scmp.eq.s32.totalorder %s18, 2
      %p41 = por %p39, %p40
      %p43 = scmp.ne.s32.totalorder %s26, %s42
      %p44 = scmp.eq.s32.totalorder %s18, 0
      %p45 = por %p43, %p44
      %s46 = ssub.s32 %s12, %s19
      %p47 = scmp.eq.s32.totalorder %s46, 0
      %s49 = sadd.s32 %s48, 1
      %s50 = scalar_select %p47, %s48, %s49
      %p53 = pneg %p47
      %p54 = scmp.eq.s32.totalorder %s12, 2
      %p55 = por %p53, %p54
      %p56 = scmp.ne.s32.totalorder %s48, %s51
      %p57 = scmp.eq.s32.totalorder %s12, 0
      %p58 = por %p56, %p57
      %p59 = scmp.ne.s32.totalorder %s48, %s51
      %p60 = scmp.eq.s32.totalorder %s17, 2
      %p61 = por %p59, %p60
      %p62 = scmp.ne.s32.totalorder %s51, %s52
      %p63 = scmp.eq.s32.totalorder %s17, 0
      %p64 = por %p62, %p63
      %p65 = scmp.ne.s32.totalorder %s51, %s52
      %p66 = scmp.eq.s32.totalorder %s18, 2
      %p67 = por %p65, %p66
      %p69 = scmp.ne.s32.totalorder %s52, %s68
      %p70 = scmp.eq.s32.totalorder %s18, 0
      %p71 = por %p69, %p70
      %s73 = sadd.s32 %s72, 1
      %p76 = scmp.eq.s32.totalorder %s12, 2
      %p77 = scmp.ne.s32.totalorder %s72, %s74
      %p78 = scmp.eq.s32.totalorder %s12, 0
      %p79 = por %p77, %p78
      %p80 = scmp.ne.s32.totalorder %s72, %s74
      %p81 = scmp.eq.s32.totalorder %s17, 2
      %p82 = por %p80, %p81
      %p83 = scmp.ne.s32.totalorder %s74, %s75
      %p84 = scmp.eq.s32.totalorder %s17, 0
      %p85 = por %p83, %p84
      %p86 = scmp.ne.s32.totalorder %s74, %s75
      %p87 = scmp.eq.s32.totalorder %s18, 2
      %p88 = por %p86, %p87
      %p90 = scmp.ne.s32.totalorder %s75, %s89
      %p91 = scmp.eq.s32.totalorder %s18, 0
      %p92 = por %p90, %p91
      %s94 = sadd.s32 %s93, 1
      %p97 = scmp.eq.s32.totalorder %s12, 2
      %p98 = scmp.ne.s32.totalorder %s93, %s95
      %p99 = scmp.eq.s32.totalorder %s12, 0
      %p100 = por %p98, %p99
      %p101 = scmp.ne.s32.totalorder %s93, %s95
      %p102 = scmp.eq.s32.totalorder %s17, 2
      %p103 = por %p101, %p102
      %p104 = scmp.ne.s32.totalorder %s95, %s96
      %p105 = scmp.eq.s32.totalorder %s17, 0
      %p106 = por %p104, %p105
      %p107 = scmp.ne.s32.totalorder %s95, %s96
      %p108 = scmp.eq.s32.totalorder %s18, 2
      %p109 = por %p107, %p108
      %p111 = scmp.ne.s32.totalorder %s96, %s110
      %p112 = scmp.eq.s32.totalorder %s18, 0
      %p113 = por %p111, %p112
      %p114 = scmp.le.s32.totalorder 1, %s12
      %p115 = scmp.lt.s32.totalorder %s12, 4
      %p116 = pnand %p114, %p115
      %p117 = pneg %p116
      // Predicated region
      $region9: #{tpu_custom_call.1} parent=5 // pred_check
        _
      $region10: #{tpu_custom_call.1} parent=5 // pred_check_branch
        %119 = sbr.rel (%p116) target = $region12
      $region11: #{tpu_custom_call.1} parent=5 // pred_region
        %s120 = ssub.s32 %s12, 1
      $region12: #{tpu_custom_call.1} parent=5 // pred_fallthru
        _
      %p121 = scmp.lt.s32.totalorder %s12, 3
      // Predicated region
      $region13: #{tpu_custom_call.1} parent=5 // pred_check
        %p122 = pneg %p121
      $region14: #{tpu_custom_call.1} parent=5 // pred_check_branch
        %124 = sbr.rel (%p122) target = $region16
      $region15: #{tpu_custom_call.1} parent=5 // pred_region
        // Predicated region
        $region17: #{tpu_custom_call.1} parent=15 // pred_check
          %p125 = pneg %p32
        $region18: #{tpu_custom_call.1} parent=15 // pred_check_branch
          %127 = sbr.rel (%p125) target = $region20
        $region19: #{tpu_custom_call.1} parent=15 // pred_region
          %s128 = smul.u32 16, %s12
          %s129 = ssub.s32 38, %s128
          %p130 = scmp.lt.s32.totalorder %s129, 16
          %s131 = scalar_select %p130, %s129, 16
          %s132 = smul.u32 128, %s131
          %p133 = scmp.lt.s32.totalorder %s128, 37
          %s134 = scalar_select %p133, %s128, 37
          %s135 = smul.addr %s134, 8
          %s136 = scalar_lea.vmem %s0, %s135
          %s137 = smul.u32 16, %s12
          %s138 = ssub.s32 38, %s137
          %p139 = scmp.lt.s32.totalorder %s138, 16
          %s140 = scalar_select %p139, %s138, 16
          %s141 = smul.u32 128, %s140
        $region20: #{tpu_custom_call.1} parent=15 // pred_fallthru
          _
        // Predicated region
        $region21: #{tpu_custom_call.1} parent=15 // pred_check
          %p142 = pneg %p58
        $region22: #{tpu_custom_call.1} parent=15 // pred_check_branch
          %144 = sbr.rel (%p142) target = $region24
        $region23: #{tpu_custom_call.1} parent=15 // pred_region
          %s145 = smul.u32 16, %s12
          %s146 = ssub.s32 38, %s145
          %p147 = scmp.lt.s32.totalorder %s146, 16
          %s148 = scalar_select %p147, %s146, 16
          %s149 = smul.u32 128, %s148
          %p150 = scmp.lt.s32.totalorder %s145, 37
          %s151 = scalar_select %p150, %s145, 37
          %s152 = smul.addr %s151, 8
          %s153 = scalar_lea.vmem %s1, %s152
          %s154 = smul.u32 16, %s12
          %s155 = ssub.s32 38, %s154
          %p156 = scmp.lt.s32.totalorder %s155, 16
          %s157 = scalar_select %p156, %s155, 16
          %s158 = smul.u32 128, %s157
        $region24: #{tpu_custom_call.1} parent=15 // pred_fallthru
          _
      $region16: #{tpu_custom_call.1} parent=5 // pred_fallthru
        _
      %p159 = scmp.le.s32.totalorder 1, %s12
      %p160 = scmp.lt.s32.totalorder %s12, 4
      %p161 = pnand %p159, %p160
      %p162 = pneg %p161
      // Predicated region
      $region25: #{tpu_custom_call.1} parent=5 // pred_check
        _
      $region26: #{tpu_custom_call.1} parent=5 // pred_check_branch
        %164 = sbr.rel (%p161) target = $region28
      $region27: #{tpu_custom_call.1} parent=5 // pred_region
        %s165 = ssub.s32 %s12, 1
        %s166 = smul.u32 16, %s17
        %s167 = ssub.s32 38, %s166
        %p168 = scmp.lt.s32.totalorder %s167, 16
        %s169 = scalar_select %p168, %s167, 16
        %s170 = smul.u32 128, %s169
        %p171 = scmp.lt.s32.totalorder %s166, 37
        %s172 = scalar_select %p171, %s166, 37
        %s173 = smul.addr %s172, 8
        %s174 = scalar_lea.vmem %s0, %s173
        %p175 = pneg %p38
        %p176 = pneg %p35
        %s177 = smul.u32 16, %s17
        %s178 = ssub.s32 38, %s177
        %p179 = scmp.lt.s32.totalorder %s178, 16
        %s180 = scalar_select %p179, %s178, 16
        %s181 = smul.u32 128, %s180
        %p182 = scmp.lt.s32.totalorder %s177, 37
        %s183 = scalar_select %p182, %s177, 37
        %s184 = smul.addr %s183, 8
        %s185 = scalar_lea.vmem %s1, %s184
        %p186 = pneg %p64
        %p187 = pneg %p61
        %p188 = pneg %p85
        %p189 = pneg %p82
        %p190 = pneg %p106
        %p191 = pneg %p103
        %s192 = smul.u32 16, %s17
        %s193 = ssub.s32 38, %s192
        %p194 = scmp.lt.s32.totalorder %s193, 16
        %s195 = scalar_select %p194, %s193, 16
        %s196 = smul.u32 128, %s195
        %p197 = scmp.lt.s32.totalorder %s192, 37
        %s198 = scalar_select %p197, %s192, 37
        %s199 = smul.addr %s198, 8
        %s200 = scalar_lea.vmem %s0, %s199
        %s201 = smul.u32 16, %s17
        %s202 = ssub.s32 38, %s201
        %p203 = scmp.lt.s32.totalorder %s202, 16
        %s204 = scalar_select %p203, %s202, 16
        %s205 = smul.u32 128, %s204
        %s206 = smul.u32 16, %s17
        %s207 = ssub.s32 38, %s206
        %p208 = scmp.lt.s32.totalorder %s207, 16
        %s209 = scalar_select %p208, %s207, 16
        %s210 = smul.u32 128, %s209
        %p211 = scmp.lt.s32.totalorder %s206, 37
        %s212 = scalar_select %p211, %s206, 37
        %s213 = smul.addr %s212, 8
        %s214 = scalar_lea.vmem %s1, %s213
        %s215 = smul.u32 16, %s17
        %s216 = ssub.s32 38, %s215
        %p217 = scmp.lt.s32.totalorder %s216, 16
        %s218 = scalar_select %p217, %s216, 16
        %s219 = smul.u32 128, %s218
        %p220 = scmp.eq.s32.totalorder %s17, 0
        // Predicated region
        $region29: #{tpu_custom_call.1} parent=27 // pred_check
          %p221 = pneg %p220
        $region30: #{tpu_custom_call.1} parent=27 // pred_check_branch
          %223 = sbr.rel (%p221) target = $region32
        $region31: #{tpu_custom_call.1} parent=27 // pred_region
          %vm224 = vcmask 0
          %225 = vst.msk [vmem:[#allocation2] sm:$0x1] %vm224, 0.0
          %vm226 = vcmask 122880
          %227 = vst.msk [vmem:[#allocation4] sm:$0x1] %vm226, 0.0
          %vm228 = vcmask 130048
          %229 = vst.msk [vmem:[#allocation6] sm:$0xff] %vm228, 0.0
          %230 = vst.msk [vmem:[#allocation6 + $0x8] sm:$0xff] %vm228, 0.0
          %v231 = vld [vmem:[%s214] sm:$0xff]
          %v232 = vld [vmem:[%s214 + $0x8] sm:$0xff]
          %v233 = vld [vmem:[%s214 + $0x10] sm:$0xff]
          %v234 = vld [vmem:[%s214 + $0x18] sm:$0xff]
          %v235 = vld [vmem:[%s214 + $0x20] sm:$0xff]
          %v236 = vld [vmem:[%s214 + $0x28] sm:$0xff]
          %v237 = vld [vmem:[%s214 + $0x30] sm:$0xff]
          %v238 = vld [vmem:[%s214 + $0x38] sm:$0xff]
          %v239 = vld [vmem:[%s214 + $0x40] sm:$0xff]
          %v240 = vld [vmem:[%s214 + $0x48] sm:$0xff]
          %v241 = vld [vmem:[%s214 + $0x50] sm:$0xff]
          %v242 = vld [vmem:[%s214 + $0x58] sm:$0xff]
          %v243 = vld [vmem:[%s214 + $0x60] sm:$0xff]
          %v244 = vld [vmem:[%s214 + $0x68] sm:$0xff]
          %v245 = vld [vmem:[%s214 + $0x70] sm:$0xff]
          %v246 = vld [vmem:[%s214 + $0x78] sm:$0xff]
          %v247 = vsel %vm228, %v231, 0.0
          %v248 = vsel %vm228, %v232, 0.0
          %v249 = vadd.f32 %v247, %v248
          %v250 = vsel %vm228, %v233, 0.0
          %v251 = vadd.f32 %v249, %v250
          %v252 = vsel %vm228, %v234, 0.0
          %v253 = vadd.f32 %v251, %v252
          %v254 = vsel %vm228, %v235, 0.0
          %v255 = vadd.f32 %v253, %v254
          %v256 = vsel %vm228, %v236, 0.0
          %v257 = vadd.f32 %v255, %v256
          %v258 = vsel %vm228, %v237, 0.0
          %v259 = vadd.f32 %v257, %v258
          %v260 = vsel %vm228, %v238, 0.0
          %v261 = vadd.f32 %v259, %v260
          %v262 = vsel %vm228, %v239, 0.0
          %v263 = vadd.f32 %v261, %v262
          %v264 = vsel %vm228, %v240, 0.0
          %v265 = vadd.f32 %v263, %v264
          %v266 = vsel %vm228, %v241, 0.0
          %v267 = vadd.f32 %v265, %v266
          %v268 = vsel %vm228, %v242, 0.0
          %v269 = vadd.f32 %v267, %v268
          %v270 = vsel %vm228, %v243, 0.0
          %v271 = vadd.f32 %v269, %v270
          %v272 = vsel %vm228, %v244, 0.0
          %v273 = vadd.f32 %v271, %v272
          %v274 = vsel %vm228, %v245, 0.0
          %v275 = vadd.f32 %v273, %v274
          %v276 = vsel %vm228, %v246, 0.0
          %v277 = vadd.f32 %v275, %v276
          %v278 = vrot.slane %v277, 4
          %v279 = vadd.f32 %v277, %v278
          %v280 = vrot.slane %v279, 2
          %v281 = vadd.f32 %v279, %v280
          %v282 = vrot.slane %v281, 1
          %v283 = vadd.f32 %v281, %v282
          %v284 = vmul.f32 %v283, 0.0078125
          %285 = vst.msk [vmem:[#allocation3] sm:$0x1] %vm226, %v284
        $region32: #{tpu_custom_call.1} parent=27 // pred_fallthru
          _
        %p286 = scmp.ne.s32.totalorder %s17, 2
        // Predicated region
        $region33: #{tpu_custom_call.1} parent=27 // pred_check
          %p287 = pneg %p286
        $region34: #{tpu_custom_call.1} parent=27 // pred_check_branch
          %289 = sbr.rel (%p287) target = $region36
        $region35: #{tpu_custom_call.1} parent=27 // pred_region
          %v290 = vld [vmem:[%s214] sm:$0xff]
          %v291 = vld [vmem:[%s214 + $0x8] sm:$0xff]
          %v292 = vld [vmem:[%s214 + $0x10] sm:$0xff]
          %v293 = vld [vmem:[%s214 + $0x18] sm:$0xff]
          %v294 = vld [vmem:[%s214 + $0x20] sm:$0xff]
          %v295 = vld [vmem:[%s214 + $0x28] sm:$0xff]
          %v296 = vld [vmem:[%s214 + $0x30] sm:$0xff]
          %v297 = vld [vmem:[%s214 + $0x38] sm:$0xff]
          %v298 = vld [vmem:[%s214 + $0x40] sm:$0xff]
          %v299 = vld [vmem:[%s214 + $0x48] sm:$0xff]
          %v300 = vld [vmem:[%s214 + $0x50] sm:$0xff]
          %v301 = vld [vmem:[%s214 + $0x58] sm:$0xff]
          %v302 = vld [vmem:[%s214 + $0x60] sm:$0xff]
          %v303 = vld [vmem:[%s214 + $0x68] sm:$0xff]
          %v304 = vld [vmem:[%s214 + $0x70] sm:$0xff]
          %v305 = vld [vmem:[%s214 + $0x78] sm:$0xff]
          %v306 = vld [vmem:[%s200] sm:$0xff]
          %v307 = vld [vmem:[%s200 + $0x8] sm:$0xff]
          %v308 = vld [vmem:[%s200 + $0x10] sm:$0xff]
          %v309 = vld [vmem:[%s200 + $0x18] sm:$0xff]
          %v310 = vld [vmem:[%s200 + $0x20] sm:$0xff]
          %v311 = vld [vmem:[%s200 + $0x28] sm:$0xff]
          %v312 = vld [vmem:[%s200 + $0x30] sm:$0xff]
          %v313 = vld [vmem:[%s200 + $0x38] sm:$0xff]
          %v314 = vld [vmem:[%s200 + $0x40] sm:$0xff]
          %v315 = vld [vmem:[%s200 + $0x48] sm:$0xff]
          %v316 = vld [vmem:[%s200 + $0x50] sm:$0xff]
          %v317 = vld [vmem:[%s200 + $0x58] sm:$0xff]
          %v318 = vld [vmem:[%s200 + $0x60] sm:$0xff]
          %v319 = vld [vmem:[%s200 + $0x68] sm:$0xff]
          %v320 = vld [vmem:[%s200 + $0x70] sm:$0xff]
          %v321 = vld [vmem:[%s200 + $0x78] sm:$0xff]
          %v322 = vld [vmem:[#allocation3] sm:$0x1]
          %v324 = vlaneseq
          %v325 = vshrl.u32 %v324, 7
          %v326 = vsub.s32 0, %v325
          %v327 = vrot.slane %v322, %v326
          %v329 = vsub.f32 %v290, %v327
          %v330 = vsub.f32 %v291, %v327
          %v331 = vsub.f32 %v292, %v327
          %v332 = vsub.f32 %v293, %v327
          %v333 = vsub.f32 %v294, %v327
          %v334 = vsub.f32 %v295, %v327
          %v335 = vsub.f32 %v296, %v327
          %v336 = vsub.f32 %v297, %v327
          %v337 = vsub.f32 %v298, %v327
          %v338 = vsub.f32 %v299, %v327
          %v339 = vsub.f32 %v300, %v327
          %v340 = vsub.f32 %v301, %v327
          %v341 = vsub.f32 %v302, %v327
          %v342 = vsub.f32 %v303, %v327
          %v343 = vsub.f32 %v304, %v327
          %v344 = vsub.f32 %v305, %v327
          %346 = vset.pattern.permute.xlu0 0
          %347 = vperm.xlu0 %346, %v306
          %v348 = vpop.permute.xlu0 %347
          %351 = vset.pattern.permute.xlu0 0
          %352 = vperm.xlu0 %351, %v307
          %v353 = vpop.permute.xlu0 %352
          %356 = vset.pattern.permute.xlu0 0
          %357 = vperm.xlu0 %356, %v308
          %v358 = vpop.permute.xlu0 %357
          %361 = vset.pattern.permute.xlu0 0
          %362 = vperm.xlu0 %361, %v309
          %v363 = vpop.permute.xlu0 %362
          %366 = vset.pattern.permute.xlu0 0
          %367 = vperm.xlu0 %366, %v310
          %v368 = vpop.permute.xlu0 %367
          %371 = vset.pattern.permute.xlu0 0
          %372 = vperm.xlu0 %371, %v311
          %v373 = vpop.permute.xlu0 %372
          %376 = vset.pattern.permute.xlu0 0
          %377 = vperm.xlu0 %376, %v312
          %v378 = vpop.permute.xlu0 %377
          %381 = vset.pattern.permute.xlu0 0
          %382 = vperm.xlu0 %381, %v313
          %v383 = vpop.permute.xlu0 %382
          %386 = vset.pattern.permute.xlu0 0
          %387 = vperm.xlu0 %386, %v314
          %v388 = vpop.permute.xlu0 %387
          %391 = vset.pattern.permute.xlu0 0
          %392 = vperm.xlu0 %391, %v315
          %v393 = vpop.permute.xlu0 %392
          %396 = vset.pattern.permute.xlu0 0
          %397 = vperm.xlu0 %396, %v316
          %v398 = vpop.permute.xlu0 %397
          %401 = vset.pattern.permute.xlu0 0
          %402 = vperm.xlu0 %401, %v317
          %v403 = vpop.permute.xlu0 %402
          %406 = vset.pattern.permute.xlu0 0
          %407 = vperm.xlu0 %406, %v318
          %v408 = vpop.permute.xlu0 %407
          %411 = vset.pattern.permute.xlu0 0
          %412 = vperm.xlu0 %411, %v319
          %v413 = vpop.permute.xlu0 %412
          %416 = vset.pattern.permute.xlu0 0
          %417 = vperm.xlu0 %416, %v320
          %v418 = vpop.permute.xlu0 %417
          %421 = vset.pattern.permute.xlu0 0
          %422 = vperm.xlu0 %421, %v321
          %v423 = vpop.permute.xlu0 %422
          %v425 = vmul.f32 %v329, %v348
          %v426 = vmul.f32 %v330, %v353
          %v427 = vmul.f32 %v331, %v358
          %v428 = vmul.f32 %v332, %v363
          %v429 = vmul.f32 %v333, %v368
          %v430 = vmul.f32 %v334, %v373
          %v431 = vmul.f32 %v335, %v378
          %v432 = vmul.f32 %v336, %v383
          %v433 = vmul.f32 %v337, %v388
          %v434 = vmul.f32 %v338, %v393
          %v435 = vmul.f32 %v339, %v398
          %v436 = vmul.f32 %v340, %v403
          %v437 = vmul.f32 %v341, %v408
          %v438 = vmul.f32 %v342, %v413
          %v439 = vmul.f32 %v343, %v418
          %v440 = vmul.f32 %v344, %v423
          %v441 = vld [vmem:[#allocation2] sm:$0x1]
          %vm442 = vcmask 7168
          %v443 = vsel %vm442, %v306, 0.0
          %v444 = vsel %vm442, %v307, 0.0
          %v445 = vadd.f32 %v443, %v444
          %v446 = vsel %vm442, %v308, 0.0
          %v447 = vadd.f32 %v445, %v446
          %v448 = vsel %vm442, %v309, 0.0
          %v449 = vadd.f32 %v447, %v448
          %v450 = vsel %vm442, %v310, 0.0
          %v451 = vadd.f32 %v449, %v450
          %v452 = vsel %vm442, %v311, 0.0
          %v453 = vadd.f32 %v451, %v452
          %v454 = vsel %vm442, %v312, 0.0
          %v455 = vadd.f32 %v453, %v454
          %v456 = vsel %vm442, %v313, 0.0
          %v457 = vadd.f32 %v455, %v456
          %v458 = vsel %vm442, %v314, 0.0
          %v459 = vadd.f32 %v457, %v458
          %v460 = vsel %vm442, %v315, 0.0
          %v461 = vadd.f32 %v459, %v460
          %v462 = vsel %vm442, %v316, 0.0
          %v463 = vadd.f32 %v461, %v462
          %v464 = vsel %vm442, %v317, 0.0
          %v465 = vadd.f32 %v463, %v464
          %v466 = vsel %vm442, %v318, 0.0
          %v467 = vadd.f32 %v465, %v466
          %v468 = vsel %vm442, %v319, 0.0
          %v469 = vadd.f32 %v467, %v468
          %v470 = vsel %vm442, %v320, 0.0
          %v471 = vadd.f32 %v469, %v470
          %v472 = vsel %vm442, %v321, 0.0
          %v473 = vadd.f32 %v471, %v472
          %v474 = vrot.slane %v473, 4
          %v475 = vadd.f32 %v473, %v474
          %v476 = vrot.slane %v475, 2
          %v477 = vadd.f32 %v475, %v476
          %v478 = vrot.slane %v477, 1
          %v479 = vadd.f32 %v477, %v478
          %v480 = vadd.f32 %v441, %v479
          %vm481 = vcmask 0
          %482 = vst.msk [vmem:[#allocation2] sm:$0x1] %vm481, %v480
          %v483 = vld [vmem:[#allocation4] sm:$0x1]
          %vm484 = vcmask 130048
          %v485 = vsel %vm484, %v425, 0.0
          %v486 = vsel %vm484, %v426, 0.0
          %v487 = vadd.f32 %v485, %v486
          %v488 = vsel %vm484, %v427, 0.0
          %v489 = vadd.f32 %v487, %v488
          %v490 = vsel %vm484, %v428, 0.0
          %v491 = vadd.f32 %v489, %v490
          %v492 = vsel %vm484, %v429, 0.0
          %v493 = vadd.f32 %v491, %v492
          %v494 = vsel %vm484, %v430, 0.0
          %v495 = vadd.f32 %v493, %v494
          %v496 = vsel %vm484, %v431, 0.0
          %v497 = vadd.f32 %v495, %v496
          %v498 = vsel %vm484, %v432, 0.0
          %v499 = vadd.f32 %v497, %v498
          %v500 = vsel %vm484, %v433, 0.0
          %v501 = vadd.f32 %v499, %v500
          %v502 = vsel %vm484, %v434, 0.0
          %v503 = vadd.f32 %v501, %v502
          %v504 = vsel %vm484, %v435, 0.0
          %v505 = vadd.f32 %v503, %v504
          %v506 = vsel %vm484, %v436, 0.0
          %v507 = vadd.f32 %v505, %v506
          %v508 = vsel %vm484, %v437, 0.0
          %v509 = vadd.f32 %v507, %v508
          %v510 = vsel %vm484, %v438, 0.0
          %v511 = vadd.f32 %v509, %v510
          %v512 = vsel %vm484, %v439, 0.0
          %v513 = vadd.f32 %v511, %v512
          %v514 = vsel %vm484, %v440, 0.0
          %v515 = vadd.f32 %v513, %v514
          %v516 = vrot.slane %v515, 4
          %v517 = vadd.f32 %v515, %v516
          %v518 = vrot.slane %v517, 2
          %v519 = vadd.f32 %v517, %v518
          %v520 = vrot.slane %v519, 1
          %v521 = vadd.f32 %v519, %v520
          %v522 = vadd.f32 %v483, %v521
          %vm523 = vcmask 122880
          %524 = vst.msk [vmem:[#allocation4] sm:$0x1] %vm523, %v522
          %v525 = vld [vmem:[#allocation6] sm:$0xff]
          %v526 = vld [vmem:[#allocation6 + $0x8] sm:$0xff]
          %527 = vxpose.xlu0.b32.start [1/16] %v329, 128
          %528 = vxpose.xlu0.b32.cont [2/16] %v330, 128
          %529 = vxpose.xlu0.b32.cont [3/16] %v331, 128
          %530 = vxpose.xlu0.b32.cont [4/16] %v332, 128
          %531 = vxpose.xlu0.b32.cont [5/16] %v333, 128
          %532 = vxpose.xlu0.b32.cont [6/16] %v334, 128
          %533 = vxpose.xlu0.b32.cont [7/16] %v335, 128
          %534 = vxpose.xlu0.b32.cont [8/16] %v336, 128
          %535 = vxpose.xlu0.b32.cont [9/16] %v337, 128
          %536 = vxpose.xlu0.b32.cont [10/16] %v338, 128
          %537 = vxpose.xlu0.b32.cont [11/16] %v339, 128
          %538 = vxpose.xlu0.b32.cont [12/16] %v340, 128
          %539 = vxpose.xlu0.b32.cont [13/16] %v341, 128
          %540 = vxpose.xlu0.b32.cont [14/16] %v342, 128
          %541 = vxpose.xlu0.b32.cont [15/16] %v343, 128
          %542 = vxpose.xlu0.b32.end [16/16] %v344, 128
          %v543 = vpop.trf.xlu0
          %v544 = vpop.trf.xlu0
          %v545 = vpop.trf.xlu0
          %v546 = vpop.trf.xlu0
          %v547 = vpop.trf.xlu0
          %v548 = vpop.trf.xlu0
          %v549 = vpop.trf.xlu0
          %v550 = vpop.trf.xlu0
          %v551 = vpop.trf.xlu0
          %v552 = vpop.trf.xlu0
          %v553 = vpop.trf.xlu0
          %v554 = vpop.trf.xlu0
          %v555 = vpop.trf.xlu0
          %v556 = vpop.trf.xlu0
          %v557 = vpop.trf.xlu0
          %v558 = vpop.trf.xlu0
          %559 = vmatprep.subr.mxu0 0.0
          %560 = vmatpush1.msra.mxu0 %v440
          %561 = vmatprep.subr.mxu0 0.0
          %562 = vmatpush1.msra.mxu0 %v439
          %563 = vmatprep.subr.mxu0 0.0
          %564 = vmatpush1.msra.mxu0 %v438
          %565 = vmatprep.subr.mxu0 0.0
          %566 = vmatpush1.msra.mxu0 %v437
          %567 = vmatprep.subr.mxu0 0.0
          %568 = vmatpush1.msra.mxu0 %v436
          %569 = vmatprep.subr.mxu0 0.0
          %570 = vmatpush1.msra.mxu0 %v435
          %571 = vmatprep.subr.mxu0 0.0
          %572 = vmatpush1.msra.mxu0 %v434
          %573 = vmatprep.subr.mxu0 0.0
          %574 = vmatpush1.msra.mxu0 %v433
          %575 = vmatprep.subr.mxu0 0.0
          %576 = vmatpush1.msra.mxu0 %v432
          %577 = vmatprep.subr.mxu0 0.0
          %578 = vmatpush1.msra.mxu0 %v431
          %579 = vmatprep.subr.mxu0 0.0
          %580 = vmatpush1.msra.mxu0 %v430
          %581 = vmatprep.subr.mxu0 0.0
          %582 = vmatpush1.msra.mxu0 %v429
          %583 = vmatprep.subr.mxu0 0.0
          %584 = vmatpush1.msra.mxu0 %v428
          %585 = vmatprep.subr.mxu0 0.0
          %586 = vmatpush1.msra.mxu0 %v427
          %587 = vmatprep.subr.mxu0 0.0
          %588 = vmatpush1.msra.mxu0 %v426
          %589 = vmatprep.subr.mxu0 0.0
          %590 = vmatpush1.msra.mxu0 %v425
          %591 = vmatprep.subr.mxu0 0.0
          %592 = vmatpush2.msra.mxu0 0.0
          %593 = vmatprep.subr.mxu0 0.0
          %594 = vmatpush2.msra.mxu0 0.0
          %595 = vmatprep.subr.mxu0 0.0
          %596 = vmatpush2.msra.mxu0 0.0
          %597 = vmatprep.subr.mxu0 0.0
          %598 = vmatpush2.msra.mxu0 0.0
          %599 = vmatprep.subr.mxu0 0.0
          %600 = vmatpush2.msra.mxu0 0.0
          %601 = vmatprep.subr.mxu0 0.0
          %602 = vmatpush2.msra.mxu0 0.0
          %603 = vmatprep.subr.mxu0 0.0
          %604 = vmatpush2.msra.mxu0 0.0
          %605 = vmatprep.subr.mxu0 0.0
          %606 = vmatpush2.msra.mxu0 0.0
          %607 = vmatprep.subr.mxu0 0.0
          %608 = vmatpush2.msra.mxu0 0.0
          %609 = vmatprep.subr.mxu0 0.0
          %610 = vmatpush2.msra.mxu0 0.0
          %611 = vmatprep.subr.mxu0 0.0
          %612 = vmatpush2.msra.mxu0 0.0
          %613 = vmatprep.subr.mxu0 0.0
          %614 = vmatpush2.msra.mxu0 0.0
          %615 = vmatprep.subr.mxu0 0.0
          %616 = vmatpush2.msra.mxu0 0.0
          %617 = vmatprep.subr.mxu0 0.0
          %618 = vmatpush2.msra.mxu0 0.0
          %619 = vmatprep.subr.mxu0 0.0
          %620 = vmatpush2.msra.mxu0 0.0
          %621 = vmatprep.subr.mxu0 0.0
          %622 = vmatpush2.msra.mxu0 0.0
          %623 = vmatprep.mubr.f32.mxu0 0.0
          %624 = vmatmul.mubr.f32.gmra.mxu0 %v543
          %v625 = vpop.f32.mrf.mxu0
          %v626 = vadd.f32 0.0, %v625
          %v627 = vpop.f32.mrf.mxu0
          %628 = vmatprep.mubr.f32.mxu0 0.0
          %629 = vmatmul.mubr.f32.gmra.mxu0 %v544
          %v630 = vpop.f32.mrf.mxu0
          %v631 = vadd.f32 0.0, %v630
          %v632 = vpop.f32.mrf.mxu0
          %633 = vdwg.mxu0
          %v634 = vadd.f32 %v525, %v626
          %v635 = vadd.f32 %v526, %v631
          %636 = vst.msk [vmem:[#allocation6] sm:$0xff] %vm484, %v634
          %637 = vst.msk [vmem:[#allocation6 + $0x8] sm:$0xff] %vm484, %v635
        $region36: #{tpu_custom_call.1} parent=27 // pred_fallthru
          _
        %p638 = scmp.eq.s32.totalorder %s17, 2
        // Predicated region
        $region37: #{tpu_custom_call.1} parent=27 // pred_check
          %p639 = pneg %p638
        $region38: #{tpu_custom_call.1} parent=27 // pred_check_branch
          %641 = sbr.rel (%p639) target = $region40
        $region39: #{tpu_custom_call.1} parent=27 // pred_region
          %v642 = vlaneseq
          %v643 = vshrl.u32 %v642, 7
          %v644 = vadd.s32 %v643, 8
          %v645 = vadd.s32 %v643, 16
          %v646 = vadd.s32 %v643, 24
          %v647 = vadd.s32 %v643, 32
          %v648 = vadd.s32 %v643, 40
          %v649 = vadd.s32 %v643, 48
          %v650 = vadd.s32 %v643, 56
          %v651 = vadd.s32 %v643, 64
          %v652 = vadd.s32 %v643, 72
          %v653 = vadd.s32 %v643, 80
          %v654 = vadd.s32 %v643, 88
          %v655 = vadd.s32 %v643, 96
          %v656 = vadd.s32 %v643, 104
          %v657 = vadd.s32 %v643, 112
          %v658 = vadd.s32 %v643, 120
          %vm659 = vcmp.lt.s32.totalorder %v643, 44
          %vm660 = vcmp.lt.s32.totalorder %v644, 44
          %vm661 = vcmp.lt.s32.totalorder %v645, 44
          %vm662 = vcmp.lt.s32.totalorder %v646, 44
          %vm663 = vcmp.lt.s32.totalorder %v647, 44
          %vm664 = vcmp.lt.s32.totalorder %v648, 44
          %vm665 = vcmp.lt.s32.totalorder %v649, 44
          %vm666 = vcmp.lt.s32.totalorder %v650, 44
          %vm667 = vcmp.lt.s32.totalorder %v651, 44
          %vm668 = vcmp.lt.s32.totalorder %v652, 44
          %vm669 = vcmp.lt.s32.totalorder %v653, 44
          %vm670 = vcmp.lt.s32.totalorder %v654, 44
          %vm671 = vcmp.lt.s32.totalorder %v655, 44
          %vm672 = vcmp.lt.s32.totalorder %v656, 44
          %vm673 = vcmp.lt.s32.totalorder %v657, 44
          %vm674 = vcmp.lt.s32.totalorder %v658, 44
          %v675 = vld [vmem:[%s214] sm:$0xff]
          %v676 = vld [vmem:[%s214 + $0x8] sm:$0xff]
          %v677 = vld [vmem:[%s214 + $0x10] sm:$0xff]
          %v678 = vld [vmem:[%s214 + $0x18] sm:$0xff]
          %v679 = vld [vmem:[%s214 + $0x20] sm:$0xff]
          %v680 = vld [vmem:[%s214 + $0x28] sm:$0xff]
          %v681 = vld [vmem:[%s214 + $0x30] sm:$0xff]
          %v682 = vld [vmem:[%s214 + $0x38] sm:$0xff]
          %v683 = vld [vmem:[%s214 + $0x40] sm:$0xff]
          %v684 = vld [vmem:[%s214 + $0x48] sm:$0xff]
          %v685 = vld [vmem:[%s214 + $0x50] sm:$0xff]
          %v686 = vld [vmem:[%s214 + $0x58] sm:$0xff]
          %v687 = vld [vmem:[%s214 + $0x60] sm:$0xff]
          %v688 = vld [vmem:[%s214 + $0x68] sm:$0xff]
          %v689 = vld [vmem:[%s214 + $0x70] sm:$0xff]
          %v690 = vld [vmem:[%s214 + $0x78] sm:$0xff]
          %v691 = vsel %vm659, 1, 0
          %v692 = vsel %vm660, 1, 0
          %v693 = vsel %vm661, 1, 0
          %v694 = vsel %vm662, 1, 0
          %v695 = vsel %vm663, 1, 0
          %v696 = vsel %vm664, 1, 0
          %v697 = vsel %vm665, 1, 0
          %v698 = vsel %vm666, 1, 0
          %v699 = vsel %vm667, 1, 0
          %v700 = vsel %vm668, 1, 0
          %v701 = vsel %vm669, 1, 0
          %v702 = vsel %vm670, 1, 0
          %v703 = vsel %vm671, 1, 0
          %v704 = vsel %vm672, 1, 0
          %v705 = vsel %vm673, 1, 0
          %v706 = vsel %vm674, 1, 0
          %vm707 = vcmp.eq.s32.totalorder %v691, 1
          %vm708 = vcmp.eq.s32.totalorder %v692, 1
          %vm709 = vcmp.eq.s32.totalorder %v693, 1
          %vm710 = vcmp.eq.s32.totalorder %v694, 1
          %vm711 = vcmp.eq.s32.totalorder %v695, 1
          %vm712 = vcmp.eq.s32.totalorder %v696, 1
          %vm713 = vcmp.eq.s32.totalorder %v697, 1
          %vm714 = vcmp.eq.s32.totalorder %v698, 1
          %vm715 = vcmp.eq.s32.totalorder %v699, 1
          %vm716 = vcmp.eq.s32.totalorder %v700, 1
          %vm717 = vcmp.eq.s32.totalorder %v701, 1
          %vm718 = vcmp.eq.s32.totalorder %v702, 1
          %vm719 = vcmp.eq.s32.totalorder %v703, 1
          %vm720 = vcmp.eq.s32.totalorder %v704, 1
          %vm721 = vcmp.eq.s32.totalorder %v705, 1
          %vm722 = vcmp.eq.s32.totalorder %v706, 1
          %v723 = vsel %vm707, %v675, 0.0
          %v724 = vsel %vm708, %v676, 0.0
          %v725 = vsel %vm709, %v677, 0.0
          %v726 = vsel %vm710, %v678, 0.0
          %v727 = vsel %vm711, %v679, 0.0
          %v728 = vsel %vm712, %v680, 0.0
          %v729 = vsel %vm713, %v681, 0.0
          %v730 = vsel %vm714, %v682, 0.0
          %v731 = vsel %vm715, %v683, 0.0
          %v732 = vsel %vm716, %v684, 0.0
          %v733 = vsel %vm717, %v685, 0.0
          %v734 = vsel %vm718, %v686, 0.0
          %v735 = vsel %vm719, %v687, 0.0
          %v736 = vsel %vm720, %v688, 0.0
          %v737 = vsel %vm721, %v689, 0.0
          %v738 = vsel %vm722, %v690, 0.0
          %v739 = vld [vmem:[%s200] sm:$0xff]
          %v740 = vld [vmem:[%s200 + $0x8] sm:$0xff]
          %v741 = vld [vmem:[%s200 + $0x10] sm:$0xff]
          %v742 = vld [vmem:[%s200 + $0x18] sm:$0xff]
          %v743 = vld [vmem:[%s200 + $0x20] sm:$0xff]
          %v744 = vld [vmem:[%s200 + $0x28] sm:$0xff]
          %v745 = vld [vmem:[%s200 + $0x30] sm:$0xff]
          %v746 = vld [vmem:[%s200 + $0x38] sm:$0xff]
          %v747 = vld [vmem:[%s200 + $0x40] sm:$0xff]
          %v748 = vld [vmem:[%s200 + $0x48] sm:$0xff]
          %v749 = vld [vmem:[%s200 + $0x50] sm:$0xff]
          %v750 = vld [vmem:[%s200 + $0x58] sm:$0xff]
          %v751 = vld [vmem:[%s200 + $0x60] sm:$0xff]
          %v752 = vld [vmem:[%s200 + $0x68] sm:$0xff]
          %v753 = vld [vmem:[%s200 + $0x70] sm:$0xff]
          %v754 = vld [vmem:[%s200 + $0x78] sm:$0xff]
          %v755 = vsel %vm659, %v739, 0.0
          %v756 = vsel %vm660, %v740, 0.0
          %v757 = vsel %vm661, %v741, 0.0
          %v758 = vsel %vm662, %v742, 0.0
          %v759 = vsel %vm663, %v743, 0.0
          %v760 = vsel %vm664, %v744, 0.0
          %v761 = vsel %vm665, %v745, 0.0
          %v762 = vsel %vm666, %v746, 0.0
          %v763 = vsel %vm667, %v747, 0.0
          %v764 = vsel %vm668, %v748, 0.0
          %v765 = vsel %vm669, %v749, 0.0
          %v766 = vsel %vm670, %v750, 0.0
          %v767 = vsel %vm671, %v751, 0.0
          %v768 = vsel %vm672, %v752, 0.0
          %v769 = vsel %vm673, %v753, 0.0
          %v770 = vsel %vm674, %v754, 0.0
          %v771 = vld [vmem:[#allocation3] sm:$0x1]
          %v773 = vlaneseq
          %v774 = vshrl.u32 %v773, 7
          %v775 = vsub.s32 0, %v774
          %v776 = vrot.slane %v771, %v775
          %v778 = vsub.f32 %v723, %v776
          %v779 = vsub.f32 %v724, %v776
          %v780 = vsub.f32 %v725, %v776
          %v781 = vsub.f32 %v726, %v776
          %v782 = vsub.f32 %v727, %v776
          %v783 = vsub.f32 %v728, %v776
          %v784 = vsub.f32 %v729, %v776
          %v785 = vsub.f32 %v730, %v776
          %v786 = vsub.f32 %v731, %v776
          %v787 = vsub.f32 %v732, %v776
          %v788 = vsub.f32 %v733, %v776
          %v789 = vsub.f32 %v734, %v776
          %v790 = vsub.f32 %v735, %v776
          %v791 = vsub.f32 %v736, %v776
          %v792 = vsub.f32 %v737, %v776
          %v793 = vsub.f32 %v738, %v776
          %795 = vset.pattern.permute.xlu0 0
          %796 = vperm.xlu0 %795, %v755
          %v797 = vpop.permute.xlu0 %796
          %800 = vset.pattern.permute.xlu0 0
          %801 = vperm.xlu0 %800, %v756
          %v802 = vpop.permute.xlu0 %801
          %805 = vset.pattern.permute.xlu0 0
          %806 = vperm.xlu0 %805, %v757
          %v807 = vpop.permute.xlu0 %806
          %810 = vset.pattern.permute.xlu0 0
          %811 = vperm.xlu0 %810, %v758
          %v812 = vpop.permute.xlu0 %811
          %815 = vset.pattern.permute.xlu0 0
          %816 = vperm.xlu0 %815, %v759
          %v817 = vpop.permute.xlu0 %816
          %820 = vset.pattern.permute.xlu0 0
          %821 = vperm.xlu0 %820, %v760
          %v822 = vpop.permute.xlu0 %821
          %825 = vset.pattern.permute.xlu0 0
          %826 = vperm.xlu0 %825, %v761
          %v827 = vpop.permute.xlu0 %826
          %830 = vset.pattern.permute.xlu0 0
          %831 = vperm.xlu0 %830, %v762
          %v832 = vpop.permute.xlu0 %831
          %835 = vset.pattern.permute.xlu0 0
          %836 = vperm.xlu0 %835, %v763
          %v837 = vpop.permute.xlu0 %836
          %840 = vset.pattern.permute.xlu0 0
          %841 = vperm.xlu0 %840, %v764
          %v842 = vpop.permute.xlu0 %841
          %845 = vset.pattern.permute.xlu0 0
          %846 = vperm.xlu0 %845, %v765
          %v847 = vpop.permute.xlu0 %846
          %850 = vset.pattern.permute.xlu0 0
          %851 = vperm.xlu0 %850, %v766
          %v852 = vpop.permute.xlu0 %851
          %855 = vset.pattern.permute.xlu0 0
          %856 = vperm.xlu0 %855, %v767
          %v857 = vpop.permute.xlu0 %856
          %860 = vset.pattern.permute.xlu0 0
          %861 = vperm.xlu0 %860, %v768
          %v862 = vpop.permute.xlu0 %861
          %865 = vset.pattern.permute.xlu0 0
          %866 = vperm.xlu0 %865, %v769
          %v867 = vpop.permute.xlu0 %866
          %870 = vset.pattern.permute.xlu0 0
          %871 = vperm.xlu0 %870, %v770
          %v872 = vpop.permute.xlu0 %871
          %v874 = vmul.f32 %v778, %v797
          %v875 = vmul.f32 %v779, %v802
          %v876 = vmul.f32 %v780, %v807
          %v877 = vmul.f32 %v781, %v812
          %v878 = vmul.f32 %v782, %v817
          %v879 = vmul.f32 %v783, %v822
          %v880 = vmul.f32 %v784, %v827
          %v881 = vmul.f32 %v785, %v832
          %v882 = vmul.f32 %v786, %v837
          %v883 = vmul.f32 %v787, %v842
          %v884 = vmul.f32 %v788, %v847
          %v885 = vmul.f32 %v789, %v852
          %v886 = vmul.f32 %v790, %v857
          %v887 = vmul.f32 %v791, %v862
          %v888 = vmul.f32 %v792, %v867
          %v889 = vmul.f32 %v793, %v872
          %v890 = vld [vmem:[#allocation2] sm:$0x1]
          %vm891 = vcmask 7168
          %v892 = vsel %vm891, %v755, 0.0
          %v893 = vsel %vm891, %v756, 0.0
          %v894 = vadd.f32 %v892, %v893
          %v895 = vsel %vm891, %v757, 0.0
          %v896 = vadd.f32 %v894, %v895
          %v897 = vsel %vm891, %v758, 0.0
          %v898 = vadd.f32 %v896, %v897
          %v899 = vsel %vm891, %v759, 0.0
          %v900 = vadd.f32 %v898, %v899
          %v901 = vsel %vm891, %v760, 0.0
          %v902 = vadd.f32 %v900, %v901
          %v903 = vsel %vm891, %v761, 0.0
          %v904 = vadd.f32 %v902, %v903
          %v905 = vsel %vm891, %v762, 0.0
          %v906 = vadd.f32 %v904, %v905
          %v907 = vsel %vm891, %v763, 0.0
          %v908 = vadd.f32 %v906, %v907
          %v909 = vsel %vm891, %v764, 0.0
          %v910 = vadd.f32 %v908, %v909
          %v911 = vsel %vm891, %v765, 0.0
          %v912 = vadd.f32 %v910, %v911
          %v913 = vsel %vm891, %v766, 0.0
          %v914 = vadd.f32 %v912, %v913
          %v915 = vsel %vm891, %v767, 0.0
          %v916 = vadd.f32 %v914, %v915
          %v917 = vsel %vm891, %v768, 0.0
          %v918 = vadd.f32 %v916, %v917
          %v919 = vsel %vm891, %v769, 0.0
          %v920 = vadd.f32 %v918, %v919
          %v921 = vsel %vm891, %v770, 0.0
          %v922 = vadd.f32 %v920, %v921
          %v923 = vrot.slane %v922, 4
          %v924 = vadd.f32 %v922, %v923
          %v925 = vrot.slane %v924, 2
          %v926 = vadd.f32 %v924, %v925
          %v927 = vrot.slane %v926, 1
          %v928 = vadd.f32 %v926, %v927
          %v929 = vadd.f32 %v890, %v928
          %vm930 = vcmask 0
          %931 = vst.msk [vmem:[#allocation2] sm:$0x1] %vm930, %v929
          %v932 = vld [vmem:[#allocation4] sm:$0x1]
          %vm933 = vcmask 130048
          %v934 = vsel %vm933, %v874, 0.0
          %v935 = vsel %vm933, %v875, 0.0
          %v936 = vadd.f32 %v934, %v935
          %v937 = vsel %vm933, %v876, 0.0
          %v938 = vadd.f32 %v936, %v937
          %v939 = vsel %vm933, %v877, 0.0
          %v940 = vadd.f32 %v938, %v939
          %v941 = vsel %vm933, %v878, 0.0
          %v942 = vadd.f32 %v940, %v941
          %v943 = vsel %vm933, %v879, 0.0
          %v944 = vadd.f32 %v942, %v943
          %v945 = vsel %vm933, %v880, 0.0
          %v946 = vadd.f32 %v944, %v945
          %v947 = vsel %vm933, %v881, 0.0
          %v948 = vadd.f32 %v946, %v947
          %v949 = vsel %vm933, %v882, 0.0
          %v950 = vadd.f32 %v948, %v949
          %v951 = vsel %vm933, %v883, 0.0
          %v952 = vadd.f32 %v950, %v951
          %v953 = vsel %vm933, %v884, 0.0
          %v954 = vadd.f32 %v952, %v953
          %v955 = vsel %vm933, %v885, 0.0
          %v956 = vadd.f32 %v954, %v955
          %v957 = vsel %vm933, %v886, 0.0
          %v958 = vadd.f32 %v956, %v957
          %v959 = vsel %vm933, %v887, 0.0
          %v960 = vadd.f32 %v958, %v959
          %v961 = vsel %vm933, %v888, 0.0
          %v962 = vadd.f32 %v960, %v961
          %v963 = vsel %vm933, %v889, 0.0
          %v964 = vadd.f32 %v962, %v963
          %v965 = vrot.slane %v964, 4
          %v966 = vadd.f32 %v964, %v965
          %v967 = vrot.slane %v966, 2
          %v968 = vadd.f32 %v966, %v967
          %v969 = vrot.slane %v968, 1
          %v970 = vadd.f32 %v968, %v969
          %v971 = vadd.f32 %v932, %v970
          %vm972 = vcmask 122880
          %973 = vst.msk [vmem:[#allocation4] sm:$0x1] %vm972, %v971
          %v974 = vld [vmem:[#allocation6] sm:$0xff]
          %v975 = vld [vmem:[#allocation6 + $0x8] sm:$0xff]
          %976 = vxpose.xlu0.b32.start [1/16] %v778, 128
          %977 = vxpose.xlu0.b32.cont [2/16] %v779, 128
          %978 = vxpose.xlu0.b32.cont [3/16] %v780, 128
          %979 = vxpose.xlu0.b32.cont [4/16] %v781, 128
          %980 = vxpose.xlu0.b32.cont [5/16] %v782, 128
          %981 = vxpose.xlu0.b32.cont [6/16] %v783, 128
          %982 = vxpose.xlu0.b32.cont [7/16] %v784, 128
          %983 = vxpose.xlu0.b32.cont [8/16] %v785, 128
          %984 = vxpose.xlu0.b32.cont [9/16] %v786, 128
          %985 = vxpose.xlu0.b32.cont [10/16] %v787, 128
          %986 = vxpose.xlu0.b32.cont [11/16] %v788, 128
          %987 = vxpose.xlu0.b32.cont [12/16] %v789, 128
          %988 = vxpose.xlu0.b32.cont [13/16] %v790, 128
          %989 = vxpose.xlu0.b32.cont [14/16] %v791, 128
          %990 = vxpose.xlu0.b32.cont [15/16] %v792, 128
          %991 = vxpose.xlu0.b32.end [16/16] %v793, 128
          %v992 = vpop.trf.xlu0
          %v993 = vpop.trf.xlu0
          %v994 = vpop.trf.xlu0
          %v995 = vpop.trf.xlu0
          %v996 = vpop.trf.xlu0
          %v997 = vpop.trf.xlu0
          %v998 = vpop.trf.xlu0
          %v999 = vpop.trf.xlu0
          %v1000 = vpop.trf.xlu0
          %v1001 = vpop.trf.xlu0
          %v1002 = vpop.trf.xlu0
          %v1003 = vpop.trf.xlu0
          %v1004 = vpop.trf.xlu0
          %v1005 = vpop.trf.xlu0
          %v1006 = vpop.trf.xlu0
          %v1007 = vpop.trf.xlu0
          %1008 = vmatprep.subr.mxu0 0.0
          %1009 = vmatpush1.msra.mxu0 %v889
          %1010 = vmatprep.subr.mxu0 0.0
          %1011 = vmatpush1.msra.mxu0 %v888
          %1012 = vmatprep.subr.mxu0 0.0
          %1013 = vmatpush1.msra.mxu0 %v887
          %1014 = vmatprep.subr.mxu0 0.0
          %1015 = vmatpush1.msra.mxu0 %v886
          %1016 = vmatprep.subr.mxu0 0.0
          %1017 = vmatpush1.msra.mxu0 %v885
          %1018 = vmatprep.subr.mxu0 0.0
          %1019 = vmatpush1.msra.mxu0 %v884
          %1020 = vmatprep.subr.mxu0 0.0
          %1021 = vmatpush1.msra.mxu0 %v883
          %1022 = vmatprep.subr.mxu0 0.0
          %1023 = vmatpush1.msra.mxu0 %v882
          %1024 = vmatprep.subr.mxu0 0.0
          %1025 = vmatpush1.msra.mxu0 %v881
          %1026 = vmatprep.subr.mxu0 0.0
          %1027 = vmatpush1.msra.mxu0 %v880
          %1028 = vmatprep.subr.mxu0 0.0
          %1029 = vmatpush1.msra.mxu0 %v879
          %1030 = vmatprep.subr.mxu0 0.0
          %1031 = vmatpush1.msra.mxu0 %v878
          %1032 = vmatprep.subr.mxu0 0.0
          %1033 = vmatpush1.msra.mxu0 %v877
          %1034 = vmatprep.subr.mxu0 0.0
          %1035 = vmatpush1.msra.mxu0 %v876
          %1036 = vmatprep.subr.mxu0 0.0
          %1037 = vmatpush1.msra.mxu0 %v875
          %1038 = vmatprep.subr.mxu0 0.0
          %1039 = vmatpush1.msra.mxu0 %v874
          %1040 = vmatprep.subr.mxu0 0.0
          %1041 = vmatpush2.msra.mxu0 0.0
          %1042 = vmatprep.subr.mxu0 0.0
          %1043 = vmatpush2.msra.mxu0 0.0
          %1044 = vmatprep.subr.mxu0 0.0
          %1045 = vmatpush2.msra.mxu0 0.0
          %1046 = vmatprep.subr.mxu0 0.0
          %1047 = vmatpush2.msra.mxu0 0.0
          %1048 = vmatprep.subr.mxu0 0.0
          %1049 = vmatpush2.msra.mxu0 0.0
          %1050 = vmatprep.subr.mxu0 0.0
          %1051 = vmatpush2.msra.mxu0 0.0
          %1052 = vmatprep.subr.mxu0 0.0
          %1053 = vmatpush2.msra.mxu0 0.0
          %1054 = vmatprep.subr.mxu0 0.0
          %1055 = vmatpush2.msra.mxu0 0.0
          %1056 = vmatprep.subr.mxu0 0.0
          %1057 = vmatpush2.msra.mxu0 0.0
          %1058 = vmatprep.subr.mxu0 0.0
          %1059 = vmatpush2.msra.mxu0 0.0
          %1060 = vmatprep.subr.mxu0 0.0
          %1061 = vmatpush2.msra.mxu0 0.0
          %1062 = vmatprep.subr.mxu0 0.0
          %1063 = vmatpush2.msra.mxu0 0.0
          %1064 = vmatprep.subr.mxu0 0.0
          %1065 = vmatpush2.msra.mxu0 0.0
          %1066 = vmatprep.subr.mxu0 0.0
          %1067 = vmatpush2.msra.mxu0 0.0
          %1068 = vmatprep.subr.mxu0 0.0
          %1069 = vmatpush2.msra.mxu0 0.0
          %1070 = vmatprep.subr.mxu0 0.0
          %1071 = vmatpush2.msra.mxu0 0.0
          %1072 = vmatprep.mubr.f32.mxu0 0.0
          %1073 = vmatmul.mubr.f32.gmra.mxu0 %v992
          %v1074 = vpop.f32.mrf.mxu0
          %v1075 = vadd.f32 0.0, %v1074
          %v1076 = vpop.f32.mrf.mxu0
          %1077 = vmatprep.mubr.f32.mxu0 0.0
          %1078 = vmatmul.mubr.f32.gmra.mxu0 %v993
          %v1079 = vpop.f32.mrf.mxu0
          %v1080 = vadd.f32 0.0, %v1079
          %v1081 = vpop.f32.mrf.mxu0
          %1082 = vdwg.mxu0
          %v1083 = vadd.f32 %v974, %v1075
          %v1084 = vadd.f32 %v975, %v1080
          %1085 = vst.msk [vmem:[#allocation6] sm:$0xff] %vm933, %v1083
          %1086 = vst.msk [vmem:[#allocation6 + $0x8] sm:$0xff] %vm933, %v1084
          %v1087 = vld [vmem:[#allocation2] sm:$0x1]
          %v1088 = vrcp.pop %v1087
          %v1089 = vmul.f32 1.0, %v1088
          %v1090 = vld [vmem:[#allocation4] sm:$0x1]
          %1092 = vset.pattern.permute.xlu0 0
          %1093 = vperm.xlu0 %1092, %v1089
          %v1094 = vpop.permute.xlu0 %1093
          %v1096 = vlaneseq
          %v1097 = vshrl.u32 %v1096, 7
          %v1098 = vsub.s32 0, %v1097
          %v1099 = vrot.slane %v1094, %v1098
          %v1100 = vmul.f32 %v1090, %v1099
          %v1101 = vld [vmem:[#allocation3] sm:$0x1]
          %v1102 = vadd.f32 %v1101, %v1100
          %1103 = vst.msk [vmem:[#allocation4] sm:$0x1] %vm972, %v1102
          %1104 = vxpose.xlu0.b32.start [1/16] %v1100, 128
          %1105 = vxpose.xlu0.b32.cont [2/16] 0.0, 128
          %1106 = vxpose.xlu0.b32.cont [3/16] 0.0, 128
          %1107 = vxpose.xlu0.b32.cont [4/16] 0.0, 128
          %1108 = vxpose.xlu0.b32.cont [5/16] 0.0, 128
          %1109 = vxpose.xlu0.b32.cont [6/16] 0.0, 128
          %1110 = vxpose.xlu0.b32.cont [7/16] 0.0, 128
          %1111 = vxpose.xlu0.b32.cont [8/16] 0.0, 128
          %1112 = vxpose.xlu0.b32.cont [9/16] 0.0, 128
          %1113 = vxpose.xlu0.b32.cont [10/16] 0.0, 128
          %1114 = vxpose.xlu0.b32.cont [11/16] 0.0, 128
          %1115 = vxpose.xlu0.b32.cont [12/16] 0.0, 128
          %1116 = vxpose.xlu0.b32.cont [13/16] 0.0, 128
          %1117 = vxpose.xlu0.b32.cont [14/16] 0.0, 128
          %1118 = vxpose.xlu0.b32.cont [15/16] 0.0, 128
          %1119 = vxpose.xlu0.b32.end [16/16] 0.0, 128
          %v1120 = vpop.trf.xlu0
          %v1121 = vpop.trf.xlu0
          %v1122 = vpop.trf.xlu0
          %v1123 = vpop.trf.xlu0
          %v1124 = vpop.trf.xlu0
          %v1125 = vpop.trf.xlu0
          %v1126 = vpop.trf.xlu0
          %v1127 = vpop.trf.xlu0
          %v1128 = vpop.trf.xlu0
          %v1129 = vpop.trf.xlu0
          %v1130 = vpop.trf.xlu0
          %v1131 = vpop.trf.xlu0
          %v1132 = vpop.trf.xlu0
          %v1133 = vpop.trf.xlu0
          %v1134 = vpop.trf.xlu0
          %v1135 = vpop.trf.xlu0
          %v1137 = vsel %vm891, %v1120, 0
          %v1140 = vsel %vm891, %v1121, 0
          %vm1142 = vcmask 1040384
          %v1144 = vsel %vm1142, %v1100, 0
          %1146 = vmatprep.subr.mxu0 0.0
          %1147 = vmatpush1.msra.mxu0 0.0
          %1148 = vmatprep.subr.mxu0 0.0
          %1149 = vmatpush1.msra.mxu0 0.0
          %1150 = vmatprep.subr.mxu0 0.0
          %1151 = vmatpush1.msra.mxu0 0.0
          %1152 = vmatprep.subr.mxu0 0.0
          %1153 = vmatpush1.msra.mxu0 0.0
          %1154 = vmatprep.subr.mxu0 0.0
          %1155 = vmatpush1.msra.mxu0 0.0
          %1156 = vmatprep.subr.mxu0 0.0
          %1157 = vmatpush1.msra.mxu0 0.0
          %1158 = vmatprep.subr.mxu0 0.0
          %1159 = vmatpush1.msra.mxu0 0.0
          %1160 = vmatprep.subr.mxu0 0.0
          %1161 = vmatpush1.msra.mxu0 0.0
          %1162 = vmatprep.subr.mxu0 0.0
          %1163 = vmatpush1.msra.mxu0 0.0
          %1164 = vmatprep.subr.mxu0 0.0
          %1165 = vmatpush1.msra.mxu0 0.0
          %1166 = vmatprep.subr.mxu0 0.0
          %1167 = vmatpush1.msra.mxu0 0.0
          %1168 = vmatprep.subr.mxu0 0.0
          %1169 = vmatpush1.msra.mxu0 0.0
          %1170 = vmatprep.subr.mxu0 0.0
          %1171 = vmatpush1.msra.mxu0 0.0
          %1172 = vmatprep.subr.mxu0 0.0
          %1173 = vmatpush1.msra.mxu0 0.0
          %1174 = vmatprep.subr.mxu0 0.0
          %1175 = vmatpush1.msra.mxu0 0.0
          %1176 = vmatprep.subr.mxu0 0.0
          %1177 = vmatpush1.msra.mxu0 %v1144
          %1178 = vmatprep.subr.mxu0 0.0
          %1179 = vmatpush2.msra.mxu0 0.0
          %1180 = vmatprep.subr.mxu0 0.0
          %1181 = vmatpush2.msra.mxu0 0.0
          %1182 = vmatprep.subr.mxu0 0.0
          %1183 = vmatpush2.msra.mxu0 0.0
          %1184 = vmatprep.subr.mxu0 0.0
          %1185 = vmatpush2.msra.mxu0 0.0
          %1186 = vmatprep.subr.mxu0 0.0
          %1187 = vmatpush2.msra.mxu0 0.0
          %1188 = vmatprep.subr.mxu0 0.0
          %1189 = vmatpush2.msra.mxu0 0.0
          %1190 = vmatprep.subr.mxu0 0.0
          %1191 = vmatpush2.msra.mxu0 0.0
          %1192 = vmatprep.subr.mxu0 0.0
          %1193 = vmatpush2.msra.mxu0 0.0
          %1194 = vmatprep.subr.mxu0 0.0
          %1195 = vmatpush2.msra.mxu0 0.0
          %1196 = vmatprep.subr.mxu0 0.0
          %1197 = vmatpush2.msra.mxu0 0.0
          %1198 = vmatprep.subr.mxu0 0.0
          %1199 = vmatpush2.msra.mxu0 0.0
          %1200 = vmatprep.subr.mxu0 0.0
          %1201 = vmatpush2.msra.mxu0 0.0
          %1202 = vmatprep.subr.mxu0 0.0
          %1203 = vmatpush2.msra.mxu0 0.0
          %1204 = vmatprep.subr.mxu0 0.0
          %1205 = vmatpush2.msra.mxu0 0.0
          %1206 = vmatprep.subr.mxu0 0.0
          %1207 = vmatpush2.msra.mxu0 0.0
          %1208 = vmatprep.subr.mxu0 0.0
          %1209 = vmatpush2.msra.mxu0 0.0
          %1210 = vmatprep.mubr.f32.mxu0 0.0
          %1211 = vmatmul.mubr.f32.gmra.mxu0 %v1137
          %v1212 = vpop.f32.mrf.mxu0
          %v1213 = vadd.f32 0.0, %v1212
          %v1214 = vpop.f32.mrf.mxu0
          %1215 = vmatprep.mubr.f32.mxu0 0.0
          %1216 = vmatmul.mubr.f32.gmra.mxu0 %v1140
          %v1217 = vpop.f32.mrf.mxu0
          %v1218 = vadd.f32 0.0, %v1217
          %v1219 = vpop.f32.mrf.mxu0
          %1220 = vdwg.mxu0
          %v1221 = vld [vmem:[#allocation6] sm:$0xff]
          %v1222 = vld [vmem:[#allocation6 + $0x8] sm:$0xff]
          %v1223 = vlaneseq
          %v1224 = vshrl.u32 %v1223, 7
          %v1225 = vsub.s32 0, %v1224
          %v1226 = vrot.slane %v1089, %v1225
          %1227 = vset.pattern.permute.xlu0 0
          %1228 = vperm.xlu0 %1227, %v1226
          %v1229 = vpop.permute.xlu0 %1228
          %v1231 = vmul.f32 %v1221, %v1229
          %v1232 = vmul.f32 %v1222, %v1229
          %v1233 = vsub.f32 %v1231, %v1213
          %v1234 = vsub.f32 %v1232, %v1218
          %v1235 = vmul.f32 %v1233, 1.0033445
          %v1236 = vmul.f32 %v1234, 1.0033445
          %1237 = vst.msk [vmem:[#allocation6] sm:$0xff] %vm933, %v1235
          %1238 = vst.msk [vmem:[#allocation6 + $0x8] sm:$0xff] %vm933, %v1236
        $region40: #{tpu_custom_call.1} parent=27 // pred_fallthru
          _
        // Predicated region
        $region41: #{tpu_custom_call.1} parent=27 // pred_check
          %p1239 = pneg %p82
        $region42: #{tpu_custom_call.1} parent=27 // pred_check_branch
          %1241 = sbr.rel (%p1239) target = $region44
        $region43: #{tpu_custom_call.1} parent=27 // pred_region
          %s1243 = ssub.s32 16, 16
          %1244 = vsyncadd [#allocation5], %s1243
          %s1246 = sshll.u32 [#allocation4], 4
          %s1247 = int_to_ptr.vmem [resolvable:$true] %s1246
          %1249 = dma.vmem_to_hbm [thread:$0]  %s1247, 16, %s2, [#allocation5]
        $region44: #{tpu_custom_call.1} parent=27 // pred_fallthru
          _
        // Predicated region
        $region45: #{tpu_custom_call.1} parent=27 // pred_check
          %p1250 = pneg %p103
        $region46: #{tpu_custom_call.1} parent=27 // pred_check_branch
          %1252 = sbr.rel (%p1250) target = $region48
        $region47: #{tpu_custom_call.1} parent=27 // pred_region
          %s1254 = ssub.s32 256, 256
          %1255 = vsyncadd [#allocation7], %s1254
          %s1256 = sshll.u32 [#allocation6], 4
          %s1257 = int_to_ptr.vmem [resolvable:$true] %s1256
          %1262 = dma.vmem_to_hbm [thread:$0]  %s1257, 256, %s3, [#allocation7], 128, 128, 8
        $region48: #{tpu_custom_call.1} parent=27 // pred_fallthru
          _
        // Predicated region
        $region49: #{tpu_custom_call.1} parent=27 // pred_check
          %p1263 = pneg %p82
        $region50: #{tpu_custom_call.1} parent=27 // pred_check_branch
          %1265 = sbr.rel (%p1263) target = $region52
        $region51: #{tpu_custom_call.1} parent=27 // pred_region
          %1266 = dma.done [#allocation5], 16
        $region52: #{tpu_custom_call.1} parent=27 // pred_fallthru
          _
        // Predicated region
        $region53: #{tpu_custom_call.1} parent=27 // pred_check
          %p1267 = pneg %p103
        $region54: #{tpu_custom_call.1} parent=27 // pred_check_branch
          %1269 = sbr.rel (%p1267) target = $region56
        $region55: #{tpu_custom_call.1} parent=27 // pred_region
          %1270 = dma.done [#allocation7], 256
        $region56: #{tpu_custom_call.1} parent=27 // pred_fallthru
          _
      $region28: #{tpu_custom_call.1} parent=5 // pred_fallthru
        _
      %p1271 = scmp.le.s32.totalorder 2, %s12
      // Predicated region
      $region57: #{tpu_custom_call.1} parent=5 // pred_check
        %p1272 = pneg %p1271
      $region58: #{tpu_custom_call.1} parent=5 // pred_check_branch
        %1274 = sbr.rel (%p1272) target = $region60
      $region59: #{tpu_custom_call.1} parent=5 // pred_region
        %s1275 = ssub.s32 %s12, 2
      $region60: #{tpu_custom_call.1} parent=5 // pred_fallthru
        _
    $region6: #{tpu_custom_call.1} parent=1 // loop_footer
      %s16 = sadd.s32 1, %s12
    $region7: #{tpu_custom_call.1} parent=1 // loop_footer_branch
      %11 = sbr.rel target = $region3
    $region8: #{tpu_custom_call.1} parent=1 // loop_exit
      _
    %1276 = vsyncpa [#allocation5], 1
    %s1277 = scalar_lea.sflag [#allocation5], 1
    %1278 = vsyncpa %s1277, 1
    %1279 = vsyncpa [#allocation7], 1

</llo_original>
